<compile_context>
chip_gen: v5e
topology: v5e:2x2
jax: 0.10.0
libtpu: 0.0.40
codegen_flags: <defaults>
</compile_context>

<pallas_src>
import functools

import jax
import jax.numpy as jnp
from jax import lax
from jax.experimental import pallas as pl
from jax.experimental.pallas import tpu as pltpu


def _round_up(x, m):
    return (x + m - 1) // m * m


def clip_kernel(scale_ref, bias_ref,           # (1,1) SMEM scalars
                img_ref,                       # [TB, C, HW_TILE] f32 image tile
                tpool_ref,                     # [BP, Dt]  f32 pooled text (resident)
                wv_ref, bv_ref,                # [C, DP] bf16, [1, DP] f32
                wt_ref, bt_ref,                # [Dt, DP] bf16, [1, DP] f32
                out_ref,                       # [TB, BP] f32 logits row tile
                pool_acc,                      # VMEM scratch [TB, C] f32
                *, inv_hw):
    k = pl.program_id(1)
    nk = pl.num_programs(1)

    @pl.when(k == 0)
    def _init():
        pool_acc[...] = jnp.zeros_like(pool_acc)

    # Partial spatial sum for this HW tile; divide by HW only once, at finalize.
    pool_acc[...] += jnp.sum(img_ref[...], axis=-1)

    @pl.when(k == nk - 1)
    def _finalize():
        # ---- visual head: projection + L2 norm (logit_scale folded in) ----
        pooled = pool_acc[...] * inv_hw                                 # [TB, C]
        # NOTE: on v7x one could instead accumulate sum(img_tile)@wv per HW tile
        # (MRB in-place accumulation); kept as a single matmul here for simplicity.
        vfeat = jnp.dot(pooled.astype(jnp.bfloat16), wv_ref[...],
                        preferred_element_type=jnp.float32) + bv_ref[...]
        vnsq = jnp.sum(vfeat * vfeat, axis=-1, keepdims=True)
        # max(., tiny) only guards the zero-padded batch rows; valid rows unchanged.
        vfeat = vfeat * (lax.rsqrt(jnp.maximum(vnsq, 1e-30)) * scale_ref[0, 0])

        # ---- text head: projection + L2 norm (mean pool done in wrapper) ----
        tfeat = jnp.dot(tpool_ref[...].astype(jnp.bfloat16), wt_ref[...],
                        preferred_element_type=jnp.float32) + bt_ref[...]
        tnsq = jnp.sum(tfeat * tfeat, axis=-1, keepdims=True)
        tfeat = tfeat * lax.rsqrt(jnp.maximum(tnsq, 1e-30))

        # ---- logits = logit_scale * img @ txt.T + logit_bias, expressed as a
        # contraction over dim 1 of both operands (no transpose materialized). ----
        logits = lax.dot_general(
            vfeat.astype(jnp.bfloat16), tfeat.astype(jnp.bfloat16),
            dimension_numbers=(((1,), (1,)), ((), ())),
            preferred_element_type=jnp.float32)
        out_ref[...] = logits + bias_ref[0, 0]


def clip_forward(image, text_ids, params, *, b_tile=128, hw_tile=128):
    """image: [B, C, H, W] f32 (NCHW); text_ids: [B, T] int32."""
    B, C, H, W = image.shape
    HW = H * W
    Dt, D = params["wt"].shape

    # ---- glue (plain JAX): text embedding gather + mean pool -> [B, Dt] ----
    txt_emb = jnp.take(params["embed"], text_ids, axis=0)          # [B, T, Dt]
    tpool = jnp.mean(txt_emb.astype(jnp.float32), axis=1)          # [B, Dt]

    # ---- MXU / lane-friendly padding (zero pad; sliced off at the end) ----
    BP = _round_up(max(B, b_tile), b_tile)      # lane-dense [*, BP] logits stores
    HWP = _round_up(HW, hw_tile)                # spatial tiles multiple of 128
    DP = _round_up(D, 128)                      # MXU-friendly feature dim

    img3 = image.reshape(B, C, HW).astype(jnp.float32)
    img3 = jnp.pad(img3, ((0, BP - B), (0, 0), (0, HWP - HW)))
    tpool_p = jnp.pad(tpool, ((0, BP - B), (0, 0)))

    wv = jnp.pad(params["wv"].astype(jnp.float32), ((0, 0), (0, DP - D))).astype(jnp.bfloat16)
    wt = jnp.pad(params["wt"].astype(jnp.float32), ((0, 0), (0, DP - D))).astype(jnp.bfloat16)
    bv = jnp.pad(params["bv"].astype(jnp.float32), ((0, 0), (0, DP - D)))
    bt = jnp.pad(params["bt"].astype(jnp.float32), ((0, 0), (0, DP - D)))

    scale = params["logit_scale"].reshape(1, 1).astype(jnp.float32)
    bias = params["logit_bias"].reshape(1, 1).astype(jnp.float32)

    nb = BP // b_tile
    nk = HWP // hw_tile

    smem = pl.BlockSpec(memory_space=pltpu.MemorySpace.SMEM)

    logits_pad = pl.pallas_call(
        functools.partial(clip_kernel, inv_hw=1.0 / HW),
        out_shape=jax.ShapeDtypeStruct((BP, BP), jnp.float32),
        grid=(nb, nk),
        in_specs=[
            smem,                                                     # logit_scale (1,1)
            smem,                                                     # logit_bias  (1,1)
            pl.BlockSpec((b_tile, C, hw_tile), lambda i, k: (i, 0, k)),  # image tiles
            pl.BlockSpec((BP, Dt), lambda i, k: (0, 0)),              # pooled text (resident)
            pl.BlockSpec((C, DP), lambda i, k: (0, 0)),               # wv (resident)
            pl.BlockSpec((1, DP), lambda i, k: (0, 0)),               # bv
            pl.BlockSpec((Dt, DP), lambda i, k: (0, 0)),              # wt
            pl.BlockSpec((1, DP), lambda i, k: (0, 0)),               # bt
        ],
        out_specs=pl.BlockSpec((b_tile, BP), lambda i, k: (i, 0)),
        scratch_shapes=[pltpu.VMEM((b_tile, C), jnp.float32)],        # pooled-sum accumulator
        compiler_params=pltpu.CompilerParams(
            dimension_semantics=("parallel", "arbitrary"),
            vmem_limit_bytes=48 * 1024 * 1024),
    )(scale, bias, img3, tpool_p, wv, bv, wt, bt)

    return logits_pad[:B, :B]


def clip_forward_ref(image, text_ids, params):
    """Plain-JAX (f32) reference mirroring the PyTorch forward semantics."""
    B, C, H, W = image.shape
    pooled = jnp.mean(image.reshape(B, C, H * W), axis=-1)
    vfeat = pooled @ params["wv"] + params["bv"]
    vfeat = vfeat / jnp.linalg.norm(vfeat, axis=-1, keepdims=True)

    txt_emb = jnp.take(params["embed"], text_ids, axis=0)
    tpool = jnp.mean(txt_emb, axis=1)
    tfeat = tpool @ params["wt"] + params["bt"]
    tfeat = tfeat / jnp.linalg.norm(tfeat, axis=-1, keepdims=True)

    return params["logit_scale"][0] * (vfeat @ tfeat.T) + params["logit_bias"][0]


if __name__ == "__main__":
    # Small shapes consistent with the module's forward.
    B, C, H, W = 4, 4, 16, 16      # image batch (NCHW)
    T, V = 8, 64                   # text tokens per sample, vocab size
    Dt, D = 32, 32                 # text embed dim, shared CLIP feature dim

    key = jax.random.PRNGKey(0)
    k_img, k_txt, k_wv, k_wt, k_emb = jax.random.split(key, 5)

    image = jax.random.normal(k_img, (B, C, H, W), dtype=jnp.float32)
    text_ids = jax.random.randint(k_txt, (B, T), 0, V, dtype=jnp.int32)

    params = {
        "wv": jax.random.normal(k_wv, (C, D), dtype=jnp.float32) * 0.1,
        "bv": jnp.zeros((1, D), dtype=jnp.float32),
        "wt": jax.random.normal(k_wt, (Dt, D), dtype=jnp.float32) * 0.1,
        "bt": jnp.zeros((1, D), dtype=jnp.float32),
        "embed": jax.random.normal(k_emb, (V, Dt), dtype=jnp.float32) * 0.1,
        # nn.Parameter(torch.tensor(10.0)) / nn.Parameter(torch.tensor(-10.0))
        "logit_scale": jnp.array([10.0], dtype=jnp.float32),
        "logit_bias": jnp.array([-10.0], dtype=jnp.float32),
    }

    logits = clip_forward(image, text_ids, params)
    logits = jax.block_until_ready(logits)

    ref = clip_forward_ref(image, text_ids, params)
    assert logits.shape == (B, B)
    # Tolerance sized for bf16 MXU operands (f32 accumulation) vs. the f32 reference.
    assert jnp.allclose(logits, ref, atol=1.5e-1, rtol=2e-2), (
        f"mismatch: max abs err {jnp.max(jnp.abs(logits - ref))}")

    print("KERNEL_OK")
</pallas_src>

<mosaic_0001>
module attributes {stable_mosaic.version = 11 : i64} {
  func.func @clip_kernel(%arg0: i32, %arg1: i32, %arg2: memref<1x1xf32, #tpu.memory_space<smem>>, %arg3: memref<1x1xf32, #tpu.memory_space<smem>>, %arg4: memref<128x4x128xf32, #tpu.memory_space<vmem>>, %arg5: memref<128x32xf32, #tpu.memory_space<vmem>>, %arg6: memref<4x128xbf16, #tpu.memory_space<vmem>>, %arg7: memref<1x128xf32, #tpu.memory_space<vmem>>, %arg8: memref<32x128xbf16, #tpu.memory_space<vmem>>, %arg9: memref<1x128xf32, #tpu.memory_space<vmem>>, %arg10: memref<128x128xf32, #tpu.memory_space<vmem>>, %arg11: memref<128x4xf32, #tpu.memory_space<vmem>>) attributes {dimension_semantics = [#tpu.dimension_semantics<parallel>, #tpu.dimension_semantics<arbitrary>], iteration_bounds = array<i64: 1, 2>, scalar_prefetch = 0 : i64, scratch_operands = 1 : i64, tpu.core_type = #tpu.core_type<tc>, window_params = [{transform_indices = @transform_0, window_bounds = array<i64: 1, 1>}, {transform_indices = @transform_1, window_bounds = array<i64: 1, 1>}, {transform_indices = @transform_2, window_bounds = array<i64: 128, 4, 128>}, {pipeline_mode = #tpu.pipeline_mode<synchronous>, transform_indices = @transform_3, window_bounds = array<i64: 128, 32>}, {pipeline_mode = #tpu.pipeline_mode<synchronous>, transform_indices = @transform_4, window_bounds = array<i64: 4, 128>}, {pipeline_mode = #tpu.pipeline_mode<synchronous>, transform_indices = @transform_5, window_bounds = array<i64: 1, 128>}, {pipeline_mode = #tpu.pipeline_mode<synchronous>, transform_indices = @transform_6, window_bounds = array<i64: 32, 128>}, {pipeline_mode = #tpu.pipeline_mode<synchronous>, transform_indices = @transform_7, window_bounds = array<i64: 1, 128>}, {transform_indices = @transform_8, window_bounds = array<i64: 128, 128>}]} {
    %c0_i32 = arith.constant 0 : i32
    %0 = arith.cmpi eq, %arg1, %c0_i32 : i32
    %1 = arith.extui %0 : i1 to i32
    %c0_i32_0 = arith.constant 0 : i32
    %2 = arith.cmpi ne, %1, %c0_i32_0 : i32
    scf.if %2 {
      %cst_8 = arith.constant 0.000000e+00 : f32
      %11 = vector.broadcast %cst_8 : f32 to vector<128x4xf32>
      %c0_9 = arith.constant 0 : index
      %c0_10 = arith.constant 0 : index
      %12 = vector.load %arg11[%c0_9, %c0_10] : memref<128x4xf32, #tpu.memory_space<vmem>>, vector<128x4xf32>
      tpu.vector_store %arg11[%c0_9, %c0_10], %11 {strides = array<i32>} : memref<128x4xf32, #tpu.memory_space<vmem>>, vector<128x4xf32>,
    } else {
    }
    %c0 = arith.constant 0 : index
    %c0_1 = arith.constant 0 : index
    %3 = vector.load %arg11[%c0, %c0_1] : memref<128x4xf32, #tpu.memory_space<vmem>>, vector<128x4xf32>
    %c0_2 = arith.constant 0 : index
    %c0_3 = arith.constant 0 : index
    %c0_4 = arith.constant 0 : index
    %4 = vector.load %arg4[%c0_2, %c0_3, %c0_4] : memref<128x4x128xf32, #tpu.memory_space<vmem>>, vector<128x4x128xf32>
    %cst = arith.constant dense<0.000000e+00> : vector<128x4xf32>
    %5 = vector.multi_reduction <add>, %4, %cst [2] : vector<128x4x128xf32> to vector<128x4xf32>
    %6 = arith.addf %3, %5 : vector<128x4xf32>
    %c0_5 = arith.constant 0 : index
    %c0_6 = arith.constant 0 : index
    %7 = vector.load %arg11[%c0_5, %c0_6] : memref<128x4xf32, #tpu.memory_space<vmem>>, vector<128x4xf32>
    tpu.vector_store %arg11[%c0_5, %c0_6], %6 {strides = array<i32>} : memref<128x4xf32, #tpu.memory_space<vmem>>, vector<128x4xf32>,
    %c1_i32 = arith.constant 1 : i32
    %8 = arith.cmpi eq, %arg1, %c1_i32 : i32
    %9 = arith.extui %8 : i1 to i32
    %c0_i32_7 = arith.constant 0 : i32
    %10 = arith.cmpi ne, %9, %c0_i32_7 : i32
    scf.if %10 {
      %c0_8 = arith.constant 0 : index
      %c0_9 = arith.constant 0 : index
      %11 = vector.load %arg11[%c0_8, %c0_9] : memref<128x4xf32, #tpu.memory_space<vmem>>, vector<128x4xf32>
      %cst_10 = arith.constant 3.906250e-03 : f32
      %12 = vector.broadcast %cst_10 : f32 to vector<128x4xf32>
      %13 = arith.mulf %11, %12 : vector<128x4xf32>
      %14 = arith.truncf %13 : vector<128x4xf32> to vector<128x4xbf16>
      %c0_11 = arith.constant 0 : index
      %c0_12 = arith.constant 0 : index
      %15 = vector.load %arg6[%c0_11, %c0_12] : memref<4x128xbf16, #tpu.memory_space<vmem>>, vector<4x128xbf16>
      %cst_13 = arith.constant dense<0.000000e+00> : vector<128x128xf32>
      %16 = tpu.matmul %14, %15, %cst_13 {dimension_numbers = #tpu.dot_dimension_numbers<[1], [0], [0], [1], [0, 0, 1, 1], [], []>} : vector<128x4xbf16>, vector<4x128xbf16>, vector<128x128xf32> -> vector<128x128xf32>
      %c0_14 = arith.constant 0 : index
      %c0_15 = arith.constant 0 : index
      %17 = vector.load %arg7[%c0_14, %c0_15] : memref<1x128xf32, #tpu.memory_space<vmem>>, vector<1x128xf32>
      %18 = vector.broadcast %17 : vector<1x128xf32> to vector<128x128xf32>
      %19 = arith.addf %16, %18 : vector<128x128xf32>
      %20 = arith.mulf %19, %19 : vector<128x128xf32>
      %cst_16 = arith.constant dense<0.000000e+00> : vector<128xf32>
      %21 = vector.multi_reduction <add>, %20, %cst_16 [1] : vector<128x128xf32> to vector<128xf32>
      %22 = vector.shape_cast %21 : vector<128xf32> to vector<128x1xf32>
      %cst_17 = arith.constant 1.000000e-30 : f32
      %23 = vector.broadcast %cst_17 : f32 to vector<128x1xf32>
      %24 = arith.maximumf %22, %23 : vector<128x1xf32>
      %25 = math.rsqrt %24 : vector<128x1xf32>
      %c0_18 = arith.constant 0 : index
      %c0_19 = arith.constant 0 : index
      %26 = memref.load %arg2[%c0_18, %c0_19] : memref<1x1xf32, #tpu.memory_space<smem>>
      %27 = vector.broadcast %26 : f32 to vector<128x1xf32>
      %28 = arith.mulf %25, %27 : vector<128x1xf32>
      %29 = vector.broadcast %28 : vector<128x1xf32> to vector<128x128xf32>
      %30 = arith.mulf %19, %29 : vector<128x128xf32>
      %c0_20 = arith.constant 0 : index
      %c0_21 = arith.constant 0 : index
      %31 = vector.load %arg5[%c0_20, %c0_21] : memref<128x32xf32, #tpu.memory_space<vmem>>, vector<128x32xf32>
      %32 = arith.truncf %31 : vector<128x32xf32> to vector<128x32xbf16>
      %c0_22 = arith.constant 0 : index
      %c0_23 = arith.constant 0 : index
      %33 = vector.load %arg8[%c0_22, %c0_23] : memref<32x128xbf16, #tpu.memory_space<vmem>>, vector<32x128xbf16>
      %cst_24 = arith.constant dense<0.000000e+00> : vector<128x128xf32>
      %34 = tpu.matmul %32, %33, %cst_24 {dimension_numbers = #tpu.dot_dimension_numbers<[1], [0], [0], [1], [0, 0, 1, 1], [], []>} : vector<128x32xbf16>, vector<32x128xbf16>, vector<128x128xf32> -> vector<128x128xf32>
      %c0_25 = arith.constant 0 : index
      %c0_26 = arith.constant 0 : index
      %35 = vector.load %arg9[%c0_25, %c0_26] : memref<1x128xf32, #tpu.memory_space<vmem>>, vector<1x128xf32>
      %36 = vector.broadcast %35 : vector<1x128xf32> to vector<128x128xf32>
      %37 = arith.addf %34, %36 : vector<128x128xf32>
      %38 = arith.mulf %37, %37 : vector<128x128xf32>
      %cst_27 = arith.constant dense<0.000000e+00> : vector<128xf32>
      %39 = vector.multi_reduction <add>, %38, %cst_27 [1] : vector<128x128xf32> to vector<128xf32>
      %40 = vector.shape_cast %39 : vector<128xf32> to vector<128x1xf32>
      %cst_28 = arith.constant 1.000000e-30 : f32
      %41 = vector.broadcast %cst_28 : f32 to vector<128x1xf32>
      %42 = arith.maximumf %40, %41 : vector<128x1xf32>
      %43 = math.rsqrt %42 : vector<128x1xf32>
      %44 = vector.broadcast %43 : vector<128x1xf32> to vector<128x128xf32>
      %45 = arith.mulf %37, %44 : vector<128x128xf32>
      %46 = arith.truncf %30 : vector<128x128xf32> to vector<128x128xbf16>
      %47 = arith.truncf %45 : vector<128x128xf32> to vector<128x128xbf16>
      %cst_29 = arith.constant dense<0.000000e+00> : vector<128x128xf32>
      %48 = tpu.matmul %46, %47, %cst_29 {dimension_numbers = #tpu.dot_dimension_numbers<[1], [1], [0], [0], [0, 0, 1, 0], [], []>} : vector<128x128xbf16>, vector<128x128xbf16>, vector<128x128xf32> -> vector<128x128xf32>
      %c0_30 = arith.constant 0 : index
      %c0_31 = arith.constant 0 : index
      %49 = memref.load %arg3[%c0_30, %c0_31] : memref<1x1xf32, #tpu.memory_space<smem>>
      %50 = vector.broadcast %49 : f32 to vector<128x128xf32>
      %51 = arith.addf %48, %50 : vector<128x128xf32>
      %c0_32 = arith.constant 0 : index
      %c0_33 = arith.constant 0 : index
      %52 = vector.load %arg10[%c0_32, %c0_33] : memref<128x128xf32, #tpu.memory_space<vmem>>, vector<128x128xf32>
      tpu.vector_store %arg10[%c0_32, %c0_33], %51 {strides = array<i32>} : memref<128x128xf32, #tpu.memory_space<vmem>>, vector<128x128xf32>,
    } else {
    }
    return
  }
  func.func @transform_0(%arg0: i32, %arg1: i32) -> (i32, i32) {
    %c0_i32 = arith.constant 0 : i32
    %c0_i32_0 = arith.constant 0 : i32
    %c0_i32_1 = arith.constant 0 : i32
    return %c0_i32, %c0_i32_0 : i32, i32
  }
  func.func @transform_1(%arg0: i32, %arg1: i32) -> (i32, i32) {
    %c0_i32 = arith.constant 0 : i32
    %c0_i32_0 = arith.constant 0 : i32
    %c0_i32_1 = arith.constant 0 : i32
    return %c0_i32, %c0_i32_0 : i32, i32
  }
  func.func @transform_2(%arg0: i32, %arg1: i32) -> (i32, i32, i32) {
    %c0_i32 = arith.constant 0 : i32
    %c0_i32_0 = arith.constant 0 : i32
    return %arg0, %c0_i32, %arg1 : i32, i32, i32
  }
  func.func @transform_3(%arg0: i32, %arg1: i32) -> (i32, i32) {
    %c0_i32 = arith.constant 0 : i32
    %c0_i32_0 = arith.constant 0 : i32
    %c0_i32_1 = arith.constant 0 : i32
    return %c0_i32, %c0_i32_0 : i32, i32
  }
  func.func @transform_4(%arg0: i32, %arg1: i32) -> (i32, i32) {
    %c0_i32 = arith.constant 0 : i32
    %c0_i32_0 = arith.constant 0 : i32
    %c0_i32_1 = arith.constant 0 : i32
    return %c0_i32, %c0_i32_0 : i32, i32
  }
  func.func @transform_5(%arg0: i32, %arg1: i32) -> (i32, i32) {
    %c0_i32 = arith.constant 0 : i32
    %c0_i32_0 = arith.constant 0 : i32
    %c0_i32_1 = arith.constant 0 : i32
    return %c0_i32, %c0_i32_0 : i32, i32
  }
  func.func @transform_6(%arg0: i32, %arg1: i32) -> (i32, i32) {
    %c0_i32 = arith.constant 0 : i32
    %c0_i32_0 = arith.constant 0 : i32
    %c0_i32_1 = arith.constant 0 : i32
    return %c0_i32, %c0_i32_0 : i32, i32
  }
  func.func @transform_7(%arg0: i32, %arg1: i32) -> (i32, i32) {
    %c0_i32 = arith.constant 0 : i32
    %c0_i32_0 = arith.constant 0 : i32
    %c0_i32_1 = arith.constant 0 : i32
    return %c0_i32, %c0_i32_0 : i32, i32
  }
  func.func @transform_8(%arg0: i32, %arg1: i32) -> (i32, i32) {
    %c0_i32 = arith.constant 0 : i32
    %c0_i32_0 = arith.constant 0 : i32
    return %arg0, %c0_i32 : i32, i32
  }
}

</mosaic_0001>

<llo_original>
// kernel: tpu_custom_call.1
$region0: #{tpu_custom_call.1}
  #allocation0 [shape = 'u32[]', space=smem, size = 0x4, offset = 0x4, fixed_abs, tag = 'smem constant byte address 0x4 - core index']
  #allocation1 [shape = 'u32[72,128]{1,0:T(1,128)}', space=vmem, size = 0x9000, scoped, tag = 'internal scratch']
  #allocation2 [shape = 'f32[128,4]{1,0:T(8,128)}', space=vmem, size = 0x10000, scoped, tag = 'scratch operand']
  #allocation3 [shape = 'f32[1,1]{1,0:T(1,128)S(6)}', space=smem, size = 0x200, scoped, tag = 'scoped memory for tpu_custom_call.1']
  #allocation4 [shape = 'f32[1,1]{1,0:T(1,128)S(6)}', space=smem, size = 0x200, scoped, tag = 'scoped memory for tpu_custom_call.1']
  %s0 = inlined_call_operand.<no memory space> [shape: f32[1,1], index: 0, kind: input, shape index: {}]
  %s1 = inlined_call_operand.<no memory space> [shape: f32[1,1], index: 1, kind: input, shape index: {}]
  %s2 = inlined_call_operand.hbm [shape: f32[128,4,256], index: 2, kind: input, shape index: {}]
  %s3 = inlined_call_operand.vmem [shape: f32[128,32], index: 3, kind: input, shape index: {}]
  %s4 = inlined_call_operand.vmem [shape: bf16[4,128], index: 4, kind: input, shape index: {}]
  %s5 = inlined_call_operand.vmem [shape: f32[1,128], index: 5, kind: input, shape index: {}]
  %s6 = inlined_call_operand.vmem [shape: bf16[32,128], index: 6, kind: input, shape index: {}]
  %s7 = inlined_call_operand.vmem [shape: f32[1,128], index: 7, kind: input, shape index: {}]
  %s8 = inlined_call_operand.hbm [shape: f32[128,128], index: 8, kind: output, shape index: {}]
  %s9 = sld [smem:[#allocation0]]
  $region77: #{tpu_custom_call.1} parent=0
    _
  %s11 = ssub.s32 1, %s9
  %s12 = scalar_select 0, %s11, %s9
  %13 = sst [smem:[#allocation3]] %s0
  %14 = sst [smem:[#allocation4]] %s1
  $region1: #{tpu_custom_call.1} parent=0
    #allocation5 [shape = 'u8[524288]{0}', space=vmem, size = 0x80000, scoped, tag = 'input window, operand 2']
    #allocation6 [shape = 's32[2]{0}', space=sflag, size = 0x8, scoped, tag = 'scoped memory for tpu_custom_call.1']
    #allocation7 [shape = 's32[2]{0}', space=sflag, size = 0x8, scoped, tag = 'scoped memory for tpu_custom_call.1']
    #allocation8 [shape = 'u8[65536]{0}', space=vmem, size = 0x10000, scoped, tag = 'output window, operand 0, single buffered']
    %15 = vsyncpa [#allocation6], 0
    %s16 = scalar_lea.sflag [#allocation6], 1
    %17 = vsyncpa %s16, 0
    %18 = vsyncpa [#allocation7], 0
    loop: start=0, step=1, limit=4
    $region2: #{tpu_custom_call.1} parent=1 // loop_pre_header
      _
    $region3: #{tpu_custom_call.1} parent=1 // loop_header
      %s20 = sphi 0, %s24
      %p21 = scmp.ge.s32.totalorder %s20, 4
      %s27 = sphi 0, %s39
      %s28 = sphi 0, %s35
      %s29 = sphi 0, %s27
      %s30 = sphi 0, %s28
      %s31 = sphi 0, %s29
      %s32 = sphi 0, %s30
      %s40 = sphi 0, %s40
      %s42 = sphi 0, %s40
      %s43 = sphi 0, %s42
      %s57 = sphi 0, %s43
      %s61 = sphi 0, %s61
      %s63 = sphi 0, %s61
      %s64 = sphi 0, %s63
      %s78 = sphi 0, %s64
      %s86 = sphi 0, %s88
      %s89 = sphi 0, %s86
      %s90 = sphi 0, %s89
      %s106 = sphi 0, %s90
      %s110 = sphi 0, %s110
      %s112 = sphi 0, %s110
      %s113 = sphi 0, %s112
      %s127 = sphi 0, %s113
      %s131 = sphi 0, %s131
      %s133 = sphi 0, %s131
      %s134 = sphi 0, %s133
      %s148 = sphi 0, %s134
      %s152 = sphi 0, %s152
      %s154 = sphi 0, %s152
      %s155 = sphi 0, %s154
      %s169 = sphi 0, %s155
      %s173 = sphi 0, %s173
      %s175 = sphi 0, %s173
      %s176 = sphi 0, %s175
      %s190 = sphi 0, %s176
      %s194 = sphi 0, %s194
      %s196 = sphi 0, %s194
      %s197 = sphi 0, %s196
      %s211 = sphi 0, %s197
      %s217 = sphi 0, %s219
      %s220 = sphi 0, %s217
      %s221 = sphi 0, %s220
      %s237 = sphi 0, %s221
    $region4: #{tpu_custom_call.1} parent=1 // loop_header_branch
      %23 = sbr.rel (%p21) target = $region8
    $region5: #{tpu_custom_call.1} parent=1 // loop_body
      %s25 = ssub.s32 %s20, 1
      %s26 = ssub.s32 %s20, 2
      %s33 = sadd.s32 1, %s28
      %p34 = scmp.ge.s32.totalorder %s33, 2
      %s35 = scalar_select %p34, 0, %s33
      %s36 = sadd.s32 1, %s27
      %s37 = scalar_select %p34, %s36, %s27
      %p38 = scmp.ge.s32.totalorder %s37, 1
      %s39 = scalar_select %p38, 0, %s37
      %s41 = sadd.s32 %s40, 1
      %p44 = scmp.eq.s32.totalorder %s20, 1
      %p45 = scmp.ne.s32.totalorder %s40, %s42
      %p46 = scmp.eq.s32.totalorder %s20, 0
      %p47 = por %p45, %p46
      %p48 = scmp.ne.s32.totalorder %s40, %s42
      %p49 = scmp.eq.s32.totalorder %s25, 1
      %p50 = por %p48, %p49
      %p51 = scmp.ne.s32.totalorder %s42, %s43
      %p52 = scmp.eq.s32.totalorder %s25, 0
      %p53 = por %p51, %p52
      %p54 = scmp.ne.s32.totalorder %s42, %s43
      %p55 = scmp.eq.s32.totalorder %s26, 1
      %p56 = por %p54, %p55
      %p58 = scmp.ne.s32.totalorder %s43, %s57
      %p59 = scmp.eq.s32.totalorder %s26, 0
      %p60 = por %p58, %p59
      %s62 = sadd.s32 %s61, 1
      %p65 = scmp.eq.s32.totalorder %s20, 1
      %p66 = scmp.ne.s32.totalorder %s61, %s63
      %p67 = scmp.eq.s32.totalorder %s20, 0
      %p68 = por %p66, %p67
      %p69 = scmp.ne.s32.totalorder %s61, %s63
      %p70 = scmp.eq.s32.totalorder %s25, 1
      %p71 = por %p69, %p70
      %p72 = scmp.ne.s32.totalorder %s63, %s64
      %p73 = scmp.eq.s32.totalorder %s25, 0
      %p74 = por %p72, %p73
      %p75 = scmp.ne.s32.totalorder %s63, %s64
      %p76 = scmp.eq.s32.totalorder %s26, 1
      %p77 = por %p75, %p76
      %p79 = scmp.ne.s32.totalorder %s64, %s78
      %p80 = scmp.eq.s32.totalorder %s26, 0
      %p81 = por %p79, %p80
      %s82 = ssub.s32 %s27, %s39
      %s83 = ssub.s32 %s28, %s35
      %s84 = sor.u32 %s82, %s83
      %p85 = scmp.eq.s32.totalorder %s84, 0
      %s87 = sadd.s32 %s86, 1
      %s88 = scalar_select %p85, %s86, %s87
      %p91 = pneg %p85
      %p92 = scmp.eq.s32.totalorder %s20, 1
      %p93 = por %p91, %p92
      %p94 = scmp.ne.s32.totalorder %s86, %s89
      %p95 = scmp.eq.s32.totalorder %s20, 0
      %p96 = por %p94, %p95
      %p97 = scmp.ne.s32.totalorder %s86, %s89
      %p98 = scmp.eq.s32.totalorder %s25, 1
      %p99 = por %p97, %p98
      %p100 = scmp.ne.s32.totalorder %s89, %s90
      %p101 = scmp.eq.s32.totalorder %s25, 0
      %p102 = por %p100, %p101
      %p103 = scmp.ne.s32.totalorder %s89, %s90
      %p104 = scmp.eq.s32.totalorder %s26, 1
      %p105 = por %p103, %p104
      %p107 = scmp.ne.s32.totalorder %s90, %s106
      %p108 = scmp.eq.s32.totalorder %s26, 0
      %p109 = por %p107, %p108
      %s111 = sadd.s32 %s110, 1
      %p114 = scmp.eq.s32.totalorder %s20, 1
      %p115 = scmp.ne.s32.totalorder %s110, %s112
      %p116 = scmp.eq.s32.totalorder %s20, 0
      %p117 = por %p115, %p116
      %p118 = scmp.ne.s32.totalorder %s110, %s112
      %p119 = scmp.eq.s32.totalorder %s25, 1
      %p120 = por %p118, %p119
      %p121 = scmp.ne.s32.totalorder %s112, %s113
      %p122 = scmp.eq.s32.totalorder %s25, 0
      %p123 = por %p121, %p122
      %p124 = scmp.ne.s32.totalorder %s112, %s113
      %p125 = scmp.eq.s32.totalorder %s26, 1
      %p126 = por %p124, %p125
      %p128 = scmp.ne.s32.totalorder %s113, %s127
      %p129 = scmp.eq.s32.totalorder %s26, 0
      %p130 = por %p128, %p129
      %s132 = sadd.s32 %s131, 1
      %p135 = scmp.eq.s32.totalorder %s20, 1
      %p136 = scmp.ne.s32.totalorder %s131, %s133
      %p137 = scmp.eq.s32.totalorder %s20, 0
      %p138 = por %p136, %p137
      %p139 = scmp.ne.s32.totalorder %s131, %s133
      %p140 = scmp.eq.s32.totalorder %s25, 1
      %p141 = por %p139, %p140
      %p142 = scmp.ne.s32.totalorder %s133, %s134
      %p143 = scmp.eq.s32.totalorder %s25, 0
      %p144 = por %p142, %p143
      %p145 = scmp.ne.s32.totalorder %s133, %s134
      %p146 = scmp.eq.s32.totalorder %s26, 1
      %p147 = por %p145, %p146
      %p149 = scmp.ne.s32.totalorder %s134, %s148
      %p150 = scmp.eq.s32.totalorder %s26, 0
      %p151 = por %p149, %p150
      %s153 = sadd.s32 %s152, 1
      %p156 = scmp.eq.s32.totalorder %s20, 1
      %p157 = scmp.ne.s32.totalorder %s152, %s154
      %p158 = scmp.eq.s32.totalorder %s20, 0
      %p159 = por %p157, %p158
      %p160 = scmp.ne.s32.totalorder %s152, %s154
      %p161 = scmp.eq.s32.totalorder %s25, 1
      %p162 = por %p160, %p161
      %p163 = scmp.ne.s32.totalorder %s154, %s155
      %p164 = scmp.eq.s32.totalorder %s25, 0
      %p165 = por %p163, %p164
      %p166 = scmp.ne.s32.totalorder %s154, %s155
      %p167 = scmp.eq.s32.totalorder %s26, 1
      %p168 = por %p166, %p167
      %p170 = scmp.ne.s32.totalorder %s155, %s169
      %p171 = scmp.eq.s32.totalorder %s26, 0
      %p172 = por %p170, %p171
      %s174 = sadd.s32 %s173, 1
      %p177 = scmp.eq.s32.totalorder %s20, 1
      %p178 = scmp.ne.s32.totalorder %s173, %s175
      %p179 = scmp.eq.s32.totalorder %s20, 0
      %p180 = por %p178, %p179
      %p181 = scmp.ne.s32.totalorder %s173, %s175
      %p182 = scmp.eq.s32.totalorder %s25, 1
      %p183 = por %p181, %p182
      %p184 = scmp.ne.s32.totalorder %s175, %s176
      %p185 = scmp.eq.s32.totalorder %s25, 0
      %p186 = por %p184, %p185
      %p187 = scmp.ne.s32.totalorder %s175, %s176
      %p188 = scmp.eq.s32.totalorder %s26, 1
      %p189 = por %p187, %p188
      %p191 = scmp.ne.s32.totalorder %s176, %s190
      %p192 = scmp.eq.s32.totalorder %s26, 0
      %p193 = por %p191, %p192
      %s195 = sadd.s32 %s194, 1
      %p198 = scmp.eq.s32.totalorder %s20, 1
      %p199 = scmp.ne.s32.totalorder %s194, %s196
      %p200 = scmp.eq.s32.totalorder %s20, 0
      %p201 = por %p199, %p200
      %p202 = scmp.ne.s32.totalorder %s194, %s196
      %p203 = scmp.eq.s32.totalorder %s25, 1
      %p204 = por %p202, %p203
      %p205 = scmp.ne.s32.totalorder %s196, %s197
      %p206 = scmp.eq.s32.totalorder %s25, 0
      %p207 = por %p205, %p206
      %p208 = scmp.ne.s32.totalorder %s196, %s197
      %p209 = scmp.eq.s32.totalorder %s26, 1
      %p210 = por %p208, %p209
      %p212 = scmp.ne.s32.totalorder %s197, %s211
      %p213 = scmp.eq.s32.totalorder %s26, 0
      %p214 = por %p212, %p213
      %s215 = ssub.s32 %s27, %s39
      %p216 = scmp.eq.s32.totalorder %s215, 0
      %s218 = sadd.s32 %s217, 1
      %s219 = scalar_select %p216, %s217, %s218
      %p222 = pneg %p216
      %p223 = scmp.eq.s32.totalorder %s20, 1
      %p224 = por %p222, %p223
      %p225 = scmp.ne.s32.totalorder %s217, %s220
      %p226 = scmp.eq.s32.totalorder %s20, 0
      %p227 = por %p225, %p226
      %p228 = scmp.ne.s32.totalorder %s217, %s220
      %p229 = scmp.eq.s32.totalorder %s25, 1
      %p230 = por %p228, %p229
      %p231 = scmp.ne.s32.totalorder %s220, %s221
      %p232 = scmp.eq.s32.totalorder %s25, 0
      %p233 = por %p231, %p232
      %p234 = scmp.ne.s32.totalorder %s220, %s221
      %p235 = scmp.eq.s32.totalorder %s26, 1
      %p236 = por %p234, %p235
      %p238 = scmp.ne.s32.totalorder %s221, %s237
      %p239 = scmp.eq.s32.totalorder %s26, 0
      %p240 = por %p238, %p239
      %p241 = scmp.le.s32.totalorder 1, %s20
      %p242 = scmp.lt.s32.totalorder %s20, 3
      %p243 = pnand %p241, %p242
      %p244 = pneg %p243
      // Predicated region
      $region9: #{tpu_custom_call.1} parent=5 // pred_check
        _
      $region10: #{tpu_custom_call.1} parent=5 // pred_check_branch
        %246 = sbr.rel (%p243) target = $region12
      $region11: #{tpu_custom_call.1} parent=5 // pred_region
        %s247 = ssub.s32 %s20, 1
        // Predicated region
        $region13: #{tpu_custom_call.1} parent=11 // pred_check
          %p248 = pneg %p53
        $region14: #{tpu_custom_call.1} parent=11 // pred_check_branch
          %250 = sbr.rel (%p248) target = $region16
        $region15: #{tpu_custom_call.1} parent=11 // pred_region
          _
        $region16: #{tpu_custom_call.1} parent=11 // pred_fallthru
          _
        // Predicated region
        $region17: #{tpu_custom_call.1} parent=11 // pred_check
          %p251 = pneg %p74
        $region18: #{tpu_custom_call.1} parent=11 // pred_check_branch
          %253 = sbr.rel (%p251) target = $region20
        $region19: #{tpu_custom_call.1} parent=11 // pred_region
          _
        $region20: #{tpu_custom_call.1} parent=11 // pred_fallthru
          _
        // Predicated region
        $region21: #{tpu_custom_call.1} parent=11 // pred_check
          %p254 = pneg %p123
        $region22: #{tpu_custom_call.1} parent=11 // pred_check_branch
          %256 = sbr.rel (%p254) target = $region24
        $region23: #{tpu_custom_call.1} parent=11 // pred_region
          _
        $region24: #{tpu_custom_call.1} parent=11 // pred_fallthru
          _
        // Predicated region
        $region25: #{tpu_custom_call.1} parent=11 // pred_check
          %p257 = pneg %p144
        $region26: #{tpu_custom_call.1} parent=11 // pred_check_branch
          %259 = sbr.rel (%p257) target = $region28
        $region27: #{tpu_custom_call.1} parent=11 // pred_region
          _
        $region28: #{tpu_custom_call.1} parent=11 // pred_fallthru
          _
        // Predicated region
        $region29: #{tpu_custom_call.1} parent=11 // pred_check
          %p260 = pneg %p165
        $region30: #{tpu_custom_call.1} parent=11 // pred_check_branch
          %262 = sbr.rel (%p260) target = $region32
        $region31: #{tpu_custom_call.1} parent=11 // pred_region
          _
        $region32: #{tpu_custom_call.1} parent=11 // pred_fallthru
          _
        // Predicated region
        $region33: #{tpu_custom_call.1} parent=11 // pred_check
          %p263 = pneg %p186
        $region34: #{tpu_custom_call.1} parent=11 // pred_check_branch
          %265 = sbr.rel (%p263) target = $region36
        $region35: #{tpu_custom_call.1} parent=11 // pred_region
          _
        $region36: #{tpu_custom_call.1} parent=11 // pred_fallthru
          _
        // Predicated region
        $region37: #{tpu_custom_call.1} parent=11 // pred_check
          %p266 = pneg %p207
        $region38: #{tpu_custom_call.1} parent=11 // pred_check_branch
          %268 = sbr.rel (%p266) target = $region40
        $region39: #{tpu_custom_call.1} parent=11 // pred_region
          _
        $region40: #{tpu_custom_call.1} parent=11 // pred_fallthru
          _
      $region12: #{tpu_custom_call.1} parent=5 // pred_fallthru
        _
      %p269 = scmp.lt.s32.totalorder %s20, 2
      // Predicated region
      $region41: #{tpu_custom_call.1} parent=5 // pred_check
        %p270 = pneg %p269
      $region42: #{tpu_custom_call.1} parent=5 // pred_check_branch
        %272 = sbr.rel (%p270) target = $region44
      $region43: #{tpu_custom_call.1} parent=5 // pred_region
        // Predicated region
        $region45: #{tpu_custom_call.1} parent=43 // pred_check
          %p273 = pneg %p96
        $region46: #{tpu_custom_call.1} parent=43 // pred_check_branch
          %275 = sbr.rel (%p273) target = $region48
        $region47: #{tpu_custom_call.1} parent=43 // pred_region
          %s276 = sand.u32 %s86, 1
          %s277 = scalar_lea.sflag [#allocation6], %s276
          %s278 = sand.u32 %s86, 1
          %s279 = smul.addr %s278, 512
          %s280 = scalar_lea.vmem [#allocation5], %s279
          %s281 = smul.u32 128, %s27
          %283 = vsyncadd %s277, 0
          %s284 = smul.addr %s281, 2
          %s285 = sadd.s32 %s28, %s284
          %s286 = smul.addr %s285, 4
          %s287 = scalar_lea.hbm %s2, %s286
          %s288 = sshll.u32 %s287, 4
          %s289 = int_to_ptr.hbm [resolvable:$true] %s288
          %s290 = sshll.u32 %s280, 4
          %s291 = int_to_ptr.vmem [resolvable:$true] %s290
          %296 = dma.hbm_to_vmem [thread:$0]  %s289, 8192, %s291, %s277, 128, 64, 4
        $region48: #{tpu_custom_call.1} parent=43 // pred_fallthru
          _
      $region44: #{tpu_custom_call.1} parent=5 // pred_fallthru
        _
      %p297 = scmp.le.s32.totalorder 1, %s20
      %p298 = scmp.lt.s32.totalorder %s20, 3
      %p299 = pnand %p297, %p298
      %p300 = pneg %p299
      // Predicated region
      $region49: #{tpu_custom_call.1} parent=5 // pred_check
        _
      $region50: #{tpu_custom_call.1} parent=5 // pred_check_branch
        %302 = sbr.rel (%p299) target = $region52
      $region51: #{tpu_custom_call.1} parent=5 // pred_region
        %s303 = ssub.s32 %s20, 1
        %s304 = sand.u32 %s89, 1
        %s305 = scalar_lea.sflag [#allocation6], %s304
        %s306 = sand.u32 %s89, 1
        %s307 = smul.addr %s306, 512
        %s308 = scalar_lea.vmem [#allocation5], %s307
        // Predicated region
        $region53: #{tpu_custom_call.1} parent=51 // pred_check
          %p309 = pneg %p102
        $region54: #{tpu_custom_call.1} parent=51 // pred_check_branch
          %311 = sbr.rel (%p309) target = $region56
        $region55: #{tpu_custom_call.1} parent=51 // pred_region
          %313 = dma.done %s305, 8192
        $region56: #{tpu_custom_call.1} parent=51 // pred_fallthru
          _
        %p314 = pneg %p53
        %p315 = pneg %p50
        %p316 = pneg %p74
        %p317 = pneg %p71
        %s318 = sand.u32 %s89, 1
        %s319 = scalar_lea.sflag [#allocation6], %s318
        %s320 = sand.u32 %s89, 1
        %s321 = smul.addr %s320, 512
        %s322 = scalar_lea.vmem [#allocation5], %s321
        %p323 = pneg %p102
        %p324 = pneg %p99
        %p325 = pneg %p123
        %p326 = pneg %p120
        %p327 = pneg %p144
        %p328 = pneg %p141
        %p329 = pneg %p165
        %p330 = pneg %p162
        %p331 = pneg %p186
        %p332 = pneg %p183
        %p333 = pneg %p207
        %p334 = pneg %p204
        %p335 = pneg %p233
        %p336 = pneg %p230
        %s337 = smul.u32 128, %s29
        %s338 = smul.u32 16, %s29
        %p340 = scmp.eq.s32.totalorder %s30, 0
        // Predicated region
        $region57: #{tpu_custom_call.1} parent=51 // pred_check
          %p341 = pneg %p340
        $region58: #{tpu_custom_call.1} parent=51 // pred_check_branch
          %343 = sbr.rel (%p341) target = $region60
        $region59: #{tpu_custom_call.1} parent=51 // pred_region
          %vm344 = vcmask 31744
          %345 = vst.msk [vmem:[#allocation2] sm:$0xff] %vm344, 0.0
          %346 = vst.msk [vmem:[#allocation2 + $0x8] sm:$0xff] %vm344, 0.0
          %347 = vst.msk [vmem:[#allocation2 + $0x10] sm:$0xff] %vm344, 0.0
          %348 = vst.msk [vmem:[#allocation2 + $0x18] sm:$0xff] %vm344, 0.0
          %349 = vst.msk [vmem:[#allocation2 + $0x20] sm:$0xff] %vm344, 0.0
          %350 = vst.msk [vmem:[#allocation2 + $0x28] sm:$0xff] %vm344, 0.0
          %351 = vst.msk [vmem:[#allocation2 + $0x30] sm:$0xff] %vm344, 0.0
          %352 = vst.msk [vmem:[#allocation2 + $0x38] sm:$0xff] %vm344, 0.0
          %353 = vst.msk [vmem:[#allocation2 + $0x40] sm:$0xff] %vm344, 0.0
          %354 = vst.msk [vmem:[#allocation2 + $0x48] sm:$0xff] %vm344, 0.0
          %355 = vst.msk [vmem:[#allocation2 + $0x50] sm:$0xff] %vm344, 0.0
          %356 = vst.msk [vmem:[#allocation2 + $0x58] sm:$0xff] %vm344, 0.0
          %357 = vst.msk [vmem:[#allocation2 + $0x60] sm:$0xff] %vm344, 0.0
          %358 = vst.msk [vmem:[#allocation2 + $0x68] sm:$0xff] %vm344, 0.0
          %359 = vst.msk [vmem:[#allocation2 + $0x70] sm:$0xff] %vm344, 0.0
          %360 = vst.msk [vmem:[#allocation2 + $0x78] sm:$0xff] %vm344, 0.0
        $region60: #{tpu_custom_call.1} parent=51 // pred_fallthru
          _
        %v361 = vld [vmem:[#allocation2] sm:$0xff]
        %v362 = vld [vmem:[#allocation2 + $0x8] sm:$0xff]
        %v363 = vld [vmem:[#allocation2 + $0x10] sm:$0xff]
        %v364 = vld [vmem:[#allocation2 + $0x18] sm:$0xff]
        %v365 = vld [vmem:[#allocation2 + $0x20] sm:$0xff]
        %v366 = vld [vmem:[#allocation2 + $0x28] sm:$0xff]
        %v367 = vld [vmem:[#allocation2 + $0x30] sm:$0xff]
        %v368 = vld [vmem:[#allocation2 + $0x38] sm:$0xff]
        %v369 = vld [vmem:[#allocation2 + $0x40] sm:$0xff]
        %v370 = vld [vmem:[#allocation2 + $0x48] sm:$0xff]
        %v371 = vld [vmem:[#allocation2 + $0x50] sm:$0xff]
        %v372 = vld [vmem:[#allocation2 + $0x58] sm:$0xff]
        %v373 = vld [vmem:[#allocation2 + $0x60] sm:$0xff]
        %v374 = vld [vmem:[#allocation2 + $0x68] sm:$0xff]
        %v375 = vld [vmem:[#allocation2 + $0x70] sm:$0xff]
        %v376 = vld [vmem:[#allocation2 + $0x78] sm:$0xff]
        %v377 = vld [vmem:[%s308] sm:$0xf]
        %v378 = vld [vmem:[%s308 + $0x4] sm:$0xf]
        %v379 = vld [vmem:[%s308 + $0x8] sm:$0xf]
        %v380 = vld [vmem:[%s308 + $0xc] sm:$0xf]
        %v381 = vld [vmem:[%s308 + $0x10] sm:$0xf]
        %v382 = vld [vmem:[%s308 + $0x14] sm:$0xf]
        %v383 = vld [vmem:[%s308 + $0x18] sm:$0xf]
        %v384 = vld [vmem:[%s308 + $0x1c] sm:$0xf]
        %v385 = vld [vmem:[%s308 + $0x20] sm:$0xf]
        %v386 = vld [vmem:[%s308 + $0x24] sm:$0xf]
        %v387 = vld [vmem:[%s308 + $0x28] sm:$0xf]
        %v388 = vld [vmem:[%s308 + $0x2c] sm:$0xf]
        %v389 = vld [vmem:[%s308 + $0x30] sm:$0xf]
        %v390 = vld [vmem:[%s308 + $0x34] sm:$0xf]
        %v391 = vld [vmem:[%s308 + $0x38] sm:$0xf]
        %v392 = vld [vmem:[%s308 + $0x3c] sm:$0xf]
        %v393 = vld [vmem:[%s308 + $0x40] sm:$0xf]
        %v394 = vld [vmem:[%s308 + $0x44] sm:$0xf]
        %v395 = vld [vmem:[%s308 + $0x48] sm:$0xf]
        %v396 = vld [vmem:[%s308 + $0x4c] sm:$0xf]
        %v397 = vld [vmem:[%s308 + $0x50] sm:$0xf]
        %v398 = vld [vmem:[%s308 + $0x54] sm:$0xf]
        %v399 = vld [vmem:[%s308 + $0x58] sm:$0xf]
        %v400 = vld [vmem:[%s308 + $0x5c] sm:$0xf]
        %v401 = vld [vmem:[%s308 + $0x60] sm:$0xf]
        %v402 = vld [vmem:[%s308 + $0x64] sm:$0xf]
        %v403 = vld [vmem:[%s308 + $0x68] sm:$0xf]
        %v404 = vld [vmem:[%s308 + $0x6c] sm:$0xf]
        %v405 = vld [vmem:[%s308 + $0x70] sm:$0xf]
        %v406 = vld [vmem:[%s308 + $0x74] sm:$0xf]
        %v407 = vld [vmem:[%s308 + $0x78] sm:$0xf]
        %v408 = vld [vmem:[%s308 + $0x7c] sm:$0xf]
        %v409 = vld [vmem:[%s308 + $0x80] sm:$0xf]
        %v410 = vld [vmem:[%s308 + $0x84] sm:$0xf]
        %v411 = vld [vmem:[%s308 + $0x88] sm:$0xf]
        %v412 = vld [vmem:[%s308 + $0x8c] sm:$0xf]
        %v413 = vld [vmem:[%s308 + $0x90] sm:$0xf]
        %v414 = vld [vmem:[%s308 + $0x94] sm:$0xf]
        %v415 = vld [vmem:[%s308 + $0x98] sm:$0xf]
        %v416 = vld [vmem:[%s308 + $0x9c] sm:$0xf]
        %v417 = vld [vmem:[%s308 + $0xa0] sm:$0xf]
        %v418 = vld [vmem:[%s308 + $0xa4] sm:$0xf]
        %v419 = vld [vmem:[%s308 + $0xa8] sm:$0xf]
        %v420 = vld [vmem:[%s308 + $0xac] sm:$0xf]
        %v421 = vld [vmem:[%s308 + $0xb0] sm:$0xf]
        %v422 = vld [vmem:[%s308 + $0xb4] sm:$0xf]
        %v423 = vld [vmem:[%s308 + $0xb8] sm:$0xf]
        %v424 = vld [vmem:[%s308 + $0xbc] sm:$0xf]
        %v425 = vld [vmem:[%s308 + $0xc0] sm:$0xf]
        %v426 = vld [vmem:[%s308 + $0xc4] sm:$0xf]
        %v427 = vld [vmem:[%s308 + $0xc8] sm:$0xf]
        %v428 = vld [vmem:[%s308 + $0xcc] sm:$0xf]
        %v429 = vld [vmem:[%s308 + $0xd0] sm:$0xf]
        %v430 = vld [vmem:[%s308 + $0xd4] sm:$0xf]
        %v431 = vld [vmem:[%s308 + $0xd8] sm:$0xf]
        %v432 = vld [vmem:[%s308 + $0xdc] sm:$0xf]
        %v433 = vld [vmem:[%s308 + $0xe0] sm:$0xf]
        %v434 = vld [vmem:[%s308 + $0xe4] sm:$0xf]
        %v435 = vld [vmem:[%s308 + $0xe8] sm:$0xf]
        %v436 = vld [vmem:[%s308 + $0xec] sm:$0xf]
        %v437 = vld [vmem:[%s308 + $0xf0] sm:$0xf]
        %v438 = vld [vmem:[%s308 + $0xf4] sm:$0xf]
        %v439 = vld [vmem:[%s308 + $0xf8] sm:$0xf]
        %v440 = vld [vmem:[%s308 + $0xfc] sm:$0xf]
        %v441 = vld [vmem:[%s308 + $0x100] sm:$0xf]
        %v442 = vld [vmem:[%s308 + $0x104] sm:$0xf]
        %v443 = vld [vmem:[%s308 + $0x108] sm:$0xf]
        %v444 = vld [vmem:[%s308 + $0x10c] sm:$0xf]
        %v445 = vld [vmem:[%s308 + $0x110] sm:$0xf]
        %v446 = vld [vmem:[%s308 + $0x114] sm:$0xf]
        %v447 = vld [vmem:[%s308 + $0x118] sm:$0xf]
        %v448 = vld [vmem:[%s308 + $0x11c] sm:$0xf]
        %v449 = vld [vmem:[%s308 + $0x120] sm:$0xf]
        %v450 = vld [vmem:[%s308 + $0x124] sm:$0xf]
        %v451 = vld [vmem:[%s308 + $0x128] sm:$0xf]
        %v452 = vld [vmem:[%s308 + $0x12c] sm:$0xf]
        %v453 = vld [vmem:[%s308 + $0x130] sm:$0xf]
        %v454 = vld [vmem:[%s308 + $0x134] sm:$0xf]
        %v455 = vld [vmem:[%s308 + $0x138] sm:$0xf]
        %v456 = vld [vmem:[%s308 + $0x13c] sm:$0xf]
        %v457 = vld [vmem:[%s308 + $0x140] sm:$0xf]
        %v458 = vld [vmem:[%s308 + $0x144] sm:$0xf]
        %v459 = vld [vmem:[%s308 + $0x148] sm:$0xf]
        %v460 = vld [vmem:[%s308 + $0x14c] sm:$0xf]
        %v461 = vld [vmem:[%s308 + $0x150] sm:$0xf]
        %v462 = vld [vmem:[%s308 + $0x154] sm:$0xf]
        %v463 = vld [vmem:[%s308 + $0x158] sm:$0xf]
        %v464 = vld [vmem:[%s308 + $0x15c] sm:$0xf]
        %v465 = vld [vmem:[%s308 + $0x160] sm:$0xf]
        %v466 = vld [vmem:[%s308 + $0x164] sm:$0xf]
        %v467 = vld [vmem:[%s308 + $0x168] sm:$0xf]
        %v468 = vld [vmem:[%s308 + $0x16c] sm:$0xf]
        %v469 = vld [vmem:[%s308 + $0x170] sm:$0xf]
        %v470 = vld [vmem:[%s308 + $0x174] sm:$0xf]
        %v471 = vld [vmem:[%s308 + $0x178] sm:$0xf]
        %v472 = vld [vmem:[%s308 + $0x17c] sm:$0xf]
        %v473 = vld [vmem:[%s308 + $0x180] sm:$0xf]
        %v474 = vld [vmem:[%s308 + $0x184] sm:$0xf]
        %v475 = vld [vmem:[%s308 + $0x188] sm:$0xf]
        %v476 = vld [vmem:[%s308 + $0x18c] sm:$0xf]
        %v477 = vld [vmem:[%s308 + $0x190] sm:$0xf]
        %v478 = vld [vmem:[%s308 + $0x194] sm:$0xf]
        %v479 = vld [vmem:[%s308 + $0x198] sm:$0xf]
        %v480 = vld [vmem:[%s308 + $0x19c] sm:$0xf]
        %v481 = vld [vmem:[%s308 + $0x1a0] sm:$0xf]
        %v482 = vld [vmem:[%s308 + $0x1a4] sm:$0xf]
        %v483 = vld [vmem:[%s308 + $0x1a8] sm:$0xf]
        %v484 = vld [vmem:[%s308 + $0x1ac] sm:$0xf]
        %v485 = vld [vmem:[%s308 + $0x1b0] sm:$0xf]
        %v486 = vld [vmem:[%s308 + $0x1b4] sm:$0xf]
        %v487 = vld [vmem:[%s308 + $0x1b8] sm:$0xf]
        %v488 = vld [vmem:[%s308 + $0x1bc] sm:$0xf]
        %v489 = vld [vmem:[%s308 + $0x1c0] sm:$0xf]
        %v490 = vld [vmem:[%s308 + $0x1c4] sm:$0xf]
        %v491 = vld [vmem:[%s308 + $0x1c8] sm:$0xf]
        %v492 = vld [vmem:[%s308 + $0x1cc] sm:$0xf]
        %v493 = vld [vmem:[%s308 + $0x1d0] sm:$0xf]
        %v494 = vld [vmem:[%s308 + $0x1d4] sm:$0xf]
        %v495 = vld [vmem:[%s308 + $0x1d8] sm:$0xf]
        %v496 = vld [vmem:[%s308 + $0x1dc] sm:$0xf]
        %v497 = vld [vmem:[%s308 + $0x1e0] sm:$0xf]
        %v498 = vld [vmem:[%s308 + $0x1e4] sm:$0xf]
        %v499 = vld [vmem:[%s308 + $0x1e8] sm:$0xf]
        %v500 = vld [vmem:[%s308 + $0x1ec] sm:$0xf]
        %v501 = vld [vmem:[%s308 + $0x1f0] sm:$0xf]
        %v502 = vld [vmem:[%s308 + $0x1f4] sm:$0xf]
        %v503 = vld [vmem:[%s308 + $0x1f8] sm:$0xf]
        %v504 = vld [vmem:[%s308 + $0x1fc] sm:$0xf]
        %vm505 = vcmask 1043456
        %v506 = vsel %vm505, %v377, 0.0
        %507 = vadd.xlane.f32.xlu0 %v506
        %v508 = vpop.xlane.xlu0 %507
        %v509 = vsel %vm505, %v378, 0.0
        %510 = vadd.xlane.f32.xlu0 %v509
        %v511 = vpop.xlane.xlu0 %510
        %v512 = vsel %vm505, %v379, 0.0
        %513 = vadd.xlane.f32.xlu0 %v512
        %v514 = vpop.xlane.xlu0 %513
        %v515 = vsel %vm505, %v380, 0.0
        %516 = vadd.xlane.f32.xlu0 %v515
        %v517 = vpop.xlane.xlu0 %516
        %v518 = vsel %vm505, %v381, 0.0
        %519 = vadd.xlane.f32.xlu0 %v518
        %v520 = vpop.xlane.xlu0 %519
        %v521 = vsel %vm505, %v382, 0.0
        %522 = vadd.xlane.f32.xlu0 %v521
        %v523 = vpop.xlane.xlu0 %522
        %v524 = vsel %vm505, %v383, 0.0
        %525 = vadd.xlane.f32.xlu0 %v524
        %v526 = vpop.xlane.xlu0 %525
        %v527 = vsel %vm505, %v384, 0.0
        %528 = vadd.xlane.f32.xlu0 %v527
        %v529 = vpop.xlane.xlu0 %528
        %v530 = vsel %vm505, %v385, 0.0
        %531 = vadd.xlane.f32.xlu0 %v530
        %v532 = vpop.xlane.xlu0 %531
        %v533 = vsel %vm505, %v386, 0.0
        %534 = vadd.xlane.f32.xlu0 %v533
        %v535 = vpop.xlane.xlu0 %534
        %v536 = vsel %vm505, %v387, 0.0
        %537 = vadd.xlane.f32.xlu0 %v536
        %v538 = vpop.xlane.xlu0 %537
        %v539 = vsel %vm505, %v388, 0.0
        %540 = vadd.xlane.f32.xlu0 %v539
        %v541 = vpop.xlane.xlu0 %540
        %v542 = vsel %vm505, %v389, 0.0
        %543 = vadd.xlane.f32.xlu0 %v542
        %v544 = vpop.xlane.xlu0 %543
        %v545 = vsel %vm505, %v390, 0.0
        %546 = vadd.xlane.f32.xlu0 %v545
        %v547 = vpop.xlane.xlu0 %546
        %v548 = vsel %vm505, %v391, 0.0
        %549 = vadd.xlane.f32.xlu0 %v548
        %v550 = vpop.xlane.xlu0 %549
        %v551 = vsel %vm505, %v392, 0.0
        %552 = vadd.xlane.f32.xlu0 %v551
        %v553 = vpop.xlane.xlu0 %552
        %v554 = vsel %vm505, %v393, 0.0
        %555 = vadd.xlane.f32.xlu0 %v554
        %v556 = vpop.xlane.xlu0 %555
        %v557 = vsel %vm505, %v394, 0.0
        %558 = vadd.xlane.f32.xlu0 %v557
        %v559 = vpop.xlane.xlu0 %558
        %v560 = vsel %vm505, %v395, 0.0
        %561 = vadd.xlane.f32.xlu0 %v560
        %v562 = vpop.xlane.xlu0 %561
        %v563 = vsel %vm505, %v396, 0.0
        %564 = vadd.xlane.f32.xlu0 %v563
        %v565 = vpop.xlane.xlu0 %564
        %v566 = vsel %vm505, %v397, 0.0
        %567 = vadd.xlane.f32.xlu0 %v566
        %v568 = vpop.xlane.xlu0 %567
        %v569 = vsel %vm505, %v398, 0.0
        %570 = vadd.xlane.f32.xlu0 %v569
        %v571 = vpop.xlane.xlu0 %570
        %v572 = vsel %vm505, %v399, 0.0
        %573 = vadd.xlane.f32.xlu0 %v572
        %v574 = vpop.xlane.xlu0 %573
        %v575 = vsel %vm505, %v400, 0.0
        %576 = vadd.xlane.f32.xlu0 %v575
        %v577 = vpop.xlane.xlu0 %576
        %v578 = vsel %vm505, %v401, 0.0
        %579 = vadd.xlane.f32.xlu0 %v578
        %v580 = vpop.xlane.xlu0 %579
        %v581 = vsel %vm505, %v402, 0.0
        %582 = vadd.xlane.f32.xlu0 %v581
        %v583 = vpop.xlane.xlu0 %582
        %v584 = vsel %vm505, %v403, 0.0
        %585 = vadd.xlane.f32.xlu0 %v584
        %v586 = vpop.xlane.xlu0 %585
        %v587 = vsel %vm505, %v404, 0.0
        %588 = vadd.xlane.f32.xlu0 %v587
        %v589 = vpop.xlane.xlu0 %588
        %v590 = vsel %vm505, %v405, 0.0
        %591 = vadd.xlane.f32.xlu0 %v590
        %v592 = vpop.xlane.xlu0 %591
        %v593 = vsel %vm505, %v406, 0.0
        %594 = vadd.xlane.f32.xlu0 %v593
        %v595 = vpop.xlane.xlu0 %594
        %v596 = vsel %vm505, %v407, 0.0
        %597 = vadd.xlane.f32.xlu0 %v596
        %v598 = vpop.xlane.xlu0 %597
        %v599 = vsel %vm505, %v408, 0.0
        %600 = vadd.xlane.f32.xlu0 %v599
        %v601 = vpop.xlane.xlu0 %600
        %v602 = vsel %vm505, %v409, 0.0
        %603 = vadd.xlane.f32.xlu0 %v602
        %v604 = vpop.xlane.xlu0 %603
        %v605 = vsel %vm505, %v410, 0.0
        %606 = vadd.xlane.f32.xlu0 %v605
        %v607 = vpop.xlane.xlu0 %606
        %v608 = vsel %vm505, %v411, 0.0
        %609 = vadd.xlane.f32.xlu0 %v608
        %v610 = vpop.xlane.xlu0 %609
        %v611 = vsel %vm505, %v412, 0.0
        %612 = vadd.xlane.f32.xlu0 %v611
        %v613 = vpop.xlane.xlu0 %612
        %v614 = vsel %vm505, %v413, 0.0
        %615 = vadd.xlane.f32.xlu0 %v614
        %v616 = vpop.xlane.xlu0 %615
        %v617 = vsel %vm505, %v414, 0.0
        %618 = vadd.xlane.f32.xlu0 %v617
        %v619 = vpop.xlane.xlu0 %618
        %v620 = vsel %vm505, %v415, 0.0
        %621 = vadd.xlane.f32.xlu0 %v620
        %v622 = vpop.xlane.xlu0 %621
        %v623 = vsel %vm505, %v416, 0.0
        %624 = vadd.xlane.f32.xlu0 %v623
        %v625 = vpop.xlane.xlu0 %624
        %v626 = vsel %vm505, %v417, 0.0
        %627 = vadd.xlane.f32.xlu0 %v626
        %v628 = vpop.xlane.xlu0 %627
        %v629 = vsel %vm505, %v418, 0.0
        %630 = vadd.xlane.f32.xlu0 %v629
        %v631 = vpop.xlane.xlu0 %630
        %v632 = vsel %vm505, %v419, 0.0
        %633 = vadd.xlane.f32.xlu0 %v632
        %v634 = vpop.xlane.xlu0 %633
        %v635 = vsel %vm505, %v420, 0.0
        %636 = vadd.xlane.f32.xlu0 %v635
        %v637 = vpop.xlane.xlu0 %636
        %v638 = vsel %vm505, %v421, 0.0
        %639 = vadd.xlane.f32.xlu0 %v638
        %v640 = vpop.xlane.xlu0 %639
        %v641 = vsel %vm505, %v422, 0.0
        %642 = vadd.xlane.f32.xlu0 %v641
        %v643 = vpop.xlane.xlu0 %642
        %v644 = vsel %vm505, %v423, 0.0
        %645 = vadd.xlane.f32.xlu0 %v644
        %v646 = vpop.xlane.xlu0 %645
        %v647 = vsel %vm505, %v424, 0.0
        %648 = vadd.xlane.f32.xlu0 %v647
        %v649 = vpop.xlane.xlu0 %648
        %v650 = vsel %vm505, %v425, 0.0
        %651 = vadd.xlane.f32.xlu0 %v650
        %v652 = vpop.xlane.xlu0 %651
        %v653 = vsel %vm505, %v426, 0.0
        %654 = vadd.xlane.f32.xlu0 %v653
        %v655 = vpop.xlane.xlu0 %654
        %v656 = vsel %vm505, %v427, 0.0
        %657 = vadd.xlane.f32.xlu0 %v656
        %v658 = vpop.xlane.xlu0 %657
        %v659 = vsel %vm505, %v428, 0.0
        %660 = vadd.xlane.f32.xlu0 %v659
        %v661 = vpop.xlane.xlu0 %660
        %v662 = vsel %vm505, %v429, 0.0
        %663 = vadd.xlane.f32.xlu0 %v662
        %v664 = vpop.xlane.xlu0 %663
        %v665 = vsel %vm505, %v430, 0.0
        %666 = vadd.xlane.f32.xlu0 %v665
        %v667 = vpop.xlane.xlu0 %666
        %v668 = vsel %vm505, %v431, 0.0
        %669 = vadd.xlane.f32.xlu0 %v668
        %v670 = vpop.xlane.xlu0 %669
        %v671 = vsel %vm505, %v432, 0.0
        %672 = vadd.xlane.f32.xlu0 %v671
        %v673 = vpop.xlane.xlu0 %672
        %v674 = vsel %vm505, %v433, 0.0
        %675 = vadd.xlane.f32.xlu0 %v674
        %v676 = vpop.xlane.xlu0 %675
        %v677 = vsel %vm505, %v434, 0.0
        %678 = vadd.xlane.f32.xlu0 %v677
        %v679 = vpop.xlane.xlu0 %678
        %v680 = vsel %vm505, %v435, 0.0
        %681 = vadd.xlane.f32.xlu0 %v680
        %v682 = vpop.xlane.xlu0 %681
        %v683 = vsel %vm505, %v436, 0.0
        %684 = vadd.xlane.f32.xlu0 %v683
        %v685 = vpop.xlane.xlu0 %684
        %v686 = vsel %vm505, %v437, 0.0
        %687 = vadd.xlane.f32.xlu0 %v686
        %v688 = vpop.xlane.xlu0 %687
        %v689 = vsel %vm505, %v438, 0.0
        %690 = vadd.xlane.f32.xlu0 %v689
        %v691 = vpop.xlane.xlu0 %690
        %v692 = vsel %vm505, %v439, 0.0
        %693 = vadd.xlane.f32.xlu0 %v692
        %v694 = vpop.xlane.xlu0 %693
        %v695 = vsel %vm505, %v440, 0.0
        %696 = vadd.xlane.f32.xlu0 %v695
        %v697 = vpop.xlane.xlu0 %696
        %v698 = vsel %vm505, %v441, 0.0
        %699 = vadd.xlane.f32.xlu0 %v698
        %v700 = vpop.xlane.xlu0 %699
        %v701 = vsel %vm505, %v442, 0.0
        %702 = vadd.xlane.f32.xlu0 %v701
        %v703 = vpop.xlane.xlu0 %702
        %v704 = vsel %vm505, %v443, 0.0
        %705 = vadd.xlane.f32.xlu0 %v704
        %v706 = vpop.xlane.xlu0 %705
        %v707 = vsel %vm505, %v444, 0.0
        %708 = vadd.xlane.f32.xlu0 %v707
        %v709 = vpop.xlane.xlu0 %708
        %v710 = vsel %vm505, %v445, 0.0
        %711 = vadd.xlane.f32.xlu0 %v710
        %v712 = vpop.xlane.xlu0 %711
        %v713 = vsel %vm505, %v446, 0.0
        %714 = vadd.xlane.f32.xlu0 %v713
        %v715 = vpop.xlane.xlu0 %714
        %v716 = vsel %vm505, %v447, 0.0
        %717 = vadd.xlane.f32.xlu0 %v716
        %v718 = vpop.xlane.xlu0 %717
        %v719 = vsel %vm505, %v448, 0.0
        %720 = vadd.xlane.f32.xlu0 %v719
        %v721 = vpop.xlane.xlu0 %720
        %v722 = vsel %vm505, %v449, 0.0
        %723 = vadd.xlane.f32.xlu0 %v722
        %v724 = vpop.xlane.xlu0 %723
        %v725 = vsel %vm505, %v450, 0.0
        %726 = vadd.xlane.f32.xlu0 %v725
        %v727 = vpop.xlane.xlu0 %726
        %v728 = vsel %vm505, %v451, 0.0
        %729 = vadd.xlane.f32.xlu0 %v728
        %v730 = vpop.xlane.xlu0 %729
        %v731 = vsel %vm505, %v452, 0.0
        %732 = vadd.xlane.f32.xlu0 %v731
        %v733 = vpop.xlane.xlu0 %732
        %v734 = vsel %vm505, %v453, 0.0
        %735 = vadd.xlane.f32.xlu0 %v734
        %v736 = vpop.xlane.xlu0 %735
        %v737 = vsel %vm505, %v454, 0.0
        %738 = vadd.xlane.f32.xlu0 %v737
        %v739 = vpop.xlane.xlu0 %738
        %v740 = vsel %vm505, %v455, 0.0
        %741 = vadd.xlane.f32.xlu0 %v740
        %v742 = vpop.xlane.xlu0 %741
        %v743 = vsel %vm505, %v456, 0.0
        %744 = vadd.xlane.f32.xlu0 %v743
        %v745 = vpop.xlane.xlu0 %744
        %v746 = vsel %vm505, %v457, 0.0
        %747 = vadd.xlane.f32.xlu0 %v746
        %v748 = vpop.xlane.xlu0 %747
        %v749 = vsel %vm505, %v458, 0.0
        %750 = vadd.xlane.f32.xlu0 %v749
        %v751 = vpop.xlane.xlu0 %750
        %v752 = vsel %vm505, %v459, 0.0
        %753 = vadd.xlane.f32.xlu0 %v752
        %v754 = vpop.xlane.xlu0 %753
        %v755 = vsel %vm505, %v460, 0.0
        %756 = vadd.xlane.f32.xlu0 %v755
        %v757 = vpop.xlane.xlu0 %756
        %v758 = vsel %vm505, %v461, 0.0
        %759 = vadd.xlane.f32.xlu0 %v758
        %v760 = vpop.xlane.xlu0 %759
        %v761 = vsel %vm505, %v462, 0.0
        %762 = vadd.xlane.f32.xlu0 %v761
        %v763 = vpop.xlane.xlu0 %762
        %v764 = vsel %vm505, %v463, 0.0
        %765 = vadd.xlane.f32.xlu0 %v764
        %v766 = vpop.xlane.xlu0 %765
        %v767 = vsel %vm505, %v464, 0.0
        %768 = vadd.xlane.f32.xlu0 %v767
        %v769 = vpop.xlane.xlu0 %768
        %v770 = vsel %vm505, %v465, 0.0
        %771 = vadd.xlane.f32.xlu0 %v770
        %v772 = vpop.xlane.xlu0 %771
        %v773 = vsel %vm505, %v466, 0.0
        %774 = vadd.xlane.f32.xlu0 %v773
        %v775 = vpop.xlane.xlu0 %774
        %v776 = vsel %vm505, %v467, 0.0
        %777 = vadd.xlane.f32.xlu0 %v776
        %v778 = vpop.xlane.xlu0 %777
        %v779 = vsel %vm505, %v468, 0.0
        %780 = vadd.xlane.f32.xlu0 %v779
        %v781 = vpop.xlane.xlu0 %780
        %v782 = vsel %vm505, %v469, 0.0
        %783 = vadd.xlane.f32.xlu0 %v782
        %v784 = vpop.xlane.xlu0 %783
        %v785 = vsel %vm505, %v470, 0.0
        %786 = vadd.xlane.f32.xlu0 %v785
        %v787 = vpop.xlane.xlu0 %786
        %v788 = vsel %vm505, %v471, 0.0
        %789 = vadd.xlane.f32.xlu0 %v788
        %v790 = vpop.xlane.xlu0 %789
        %v791 = vsel %vm505, %v472, 0.0
        %792 = vadd.xlane.f32.xlu0 %v791
        %v793 = vpop.xlane.xlu0 %792
        %v794 = vsel %vm505, %v473, 0.0
        %795 = vadd.xlane.f32.xlu0 %v794
        %v796 = vpop.xlane.xlu0 %795
        %v797 = vsel %vm505, %v474, 0.0
        %798 = vadd.xlane.f32.xlu0 %v797
        %v799 = vpop.xlane.xlu0 %798
        %v800 = vsel %vm505, %v475, 0.0
        %801 = vadd.xlane.f32.xlu0 %v800
        %v802 = vpop.xlane.xlu0 %801
        %v803 = vsel %vm505, %v476, 0.0
        %804 = vadd.xlane.f32.xlu0 %v803
        %v805 = vpop.xlane.xlu0 %804
        %v806 = vsel %vm505, %v477, 0.0
        %807 = vadd.xlane.f32.xlu0 %v806
        %v808 = vpop.xlane.xlu0 %807
        %v809 = vsel %vm505, %v478, 0.0
        %810 = vadd.xlane.f32.xlu0 %v809
        %v811 = vpop.xlane.xlu0 %810
        %v812 = vsel %vm505, %v479, 0.0
        %813 = vadd.xlane.f32.xlu0 %v812
        %v814 = vpop.xlane.xlu0 %813
        %v815 = vsel %vm505, %v480, 0.0
        %816 = vadd.xlane.f32.xlu0 %v815
        %v817 = vpop.xlane.xlu0 %816
        %v818 = vsel %vm505, %v481, 0.0
        %819 = vadd.xlane.f32.xlu0 %v818
        %v820 = vpop.xlane.xlu0 %819
        %v821 = vsel %vm505, %v482, 0.0
        %822 = vadd.xlane.f32.xlu0 %v821
        %v823 = vpop.xlane.xlu0 %822
        %v824 = vsel %vm505, %v483, 0.0
        %825 = vadd.xlane.f32.xlu0 %v824
        %v826 = vpop.xlane.xlu0 %825
        %v827 = vsel %vm505, %v484, 0.0
        %828 = vadd.xlane.f32.xlu0 %v827
        %v829 = vpop.xlane.xlu0 %828
        %v830 = vsel %vm505, %v485, 0.0
        %831 = vadd.xlane.f32.xlu0 %v830
        %v832 = vpop.xlane.xlu0 %831
        %v833 = vsel %vm505, %v486, 0.0
        %834 = vadd.xlane.f32.xlu0 %v833
        %v835 = vpop.xlane.xlu0 %834
        %v836 = vsel %vm505, %v487, 0.0
        %837 = vadd.xlane.f32.xlu0 %v836
        %v838 = vpop.xlane.xlu0 %837
        %v839 = vsel %vm505, %v488, 0.0
        %840 = vadd.xlane.f32.xlu0 %v839
        %v841 = vpop.xlane.xlu0 %840
        %v842 = vsel %vm505, %v489, 0.0
        %843 = vadd.xlane.f32.xlu0 %v842
        %v844 = vpop.xlane.xlu0 %843
        %v845 = vsel %vm505, %v490, 0.0
        %846 = vadd.xlane.f32.xlu0 %v845
        %v847 = vpop.xlane.xlu0 %846
        %v848 = vsel %vm505, %v491, 0.0
        %849 = vadd.xlane.f32.xlu0 %v848
        %v850 = vpop.xlane.xlu0 %849
        %v851 = vsel %vm505, %v492, 0.0
        %852 = vadd.xlane.f32.xlu0 %v851
        %v853 = vpop.xlane.xlu0 %852
        %v854 = vsel %vm505, %v493, 0.0
        %855 = vadd.xlane.f32.xlu0 %v854
        %v856 = vpop.xlane.xlu0 %855
        %v857 = vsel %vm505, %v494, 0.0
        %858 = vadd.xlane.f32.xlu0 %v857
        %v859 = vpop.xlane.xlu0 %858
        %v860 = vsel %vm505, %v495, 0.0
        %861 = vadd.xlane.f32.xlu0 %v860
        %v862 = vpop.xlane.xlu0 %861
        %v863 = vsel %vm505, %v496, 0.0
        %864 = vadd.xlane.f32.xlu0 %v863
        %v865 = vpop.xlane.xlu0 %864
        %v866 = vsel %vm505, %v497, 0.0
        %867 = vadd.xlane.f32.xlu0 %v866
        %v868 = vpop.xlane.xlu0 %867
        %v869 = vsel %vm505, %v498, 0.0
        %870 = vadd.xlane.f32.xlu0 %v869
        %v871 = vpop.xlane.xlu0 %870
        %v872 = vsel %vm505, %v499, 0.0
        %873 = vadd.xlane.f32.xlu0 %v872
        %v874 = vpop.xlane.xlu0 %873
        %v875 = vsel %vm505, %v500, 0.0
        %876 = vadd.xlane.f32.xlu0 %v875
        %v877 = vpop.xlane.xlu0 %876
        %v878 = vsel %vm505, %v501, 0.0
        %879 = vadd.xlane.f32.xlu0 %v878
        %v880 = vpop.xlane.xlu0 %879
        %v881 = vsel %vm505, %v502, 0.0
        %882 = vadd.xlane.f32.xlu0 %v881
        %v883 = vpop.xlane.xlu0 %882
        %v884 = vsel %vm505, %v503, 0.0
        %885 = vadd.xlane.f32.xlu0 %v884
        %v886 = vpop.xlane.xlu0 %885
        %v887 = vsel %vm505, %v504, 0.0
        %888 = vadd.xlane.f32.xlu0 %v887
        %v889 = vpop.xlane.xlu0 %888
        %v1018 = vlaneseq
        %v1019 = vand.u32 %v1018, 127
        %v1020 = vperm.slane %v508, %v1019
        %v1021 = vperm.slane %v511, %v1019
        %v1022 = vperm.slane %v514, %v1019
        %v1023 = vperm.slane %v517, %v1019
        %v1024 = vperm.slane %v520, %v1019
        %v1025 = vperm.slane %v523, %v1019
        %v1026 = vperm.slane %v526, %v1019
        %v1027 = vperm.slane %v529, %v1019
        %v1028 = vperm.slane %v532, %v1019
        %v1029 = vperm.slane %v535, %v1019
        %v1030 = vperm.slane %v538, %v1019
        %v1031 = vperm.slane %v541, %v1019
        %v1032 = vperm.slane %v544, %v1019
        %v1033 = vperm.slane %v547, %v1019
        %v1034 = vperm.slane %v550, %v1019
        %v1035 = vperm.slane %v553, %v1019
        %v1036 = vperm.slane %v556, %v1019
        %v1037 = vperm.slane %v559, %v1019
        %v1038 = vperm.slane %v562, %v1019
        %v1039 = vperm.slane %v565, %v1019
        %v1040 = vperm.slane %v568, %v1019
        %v1041 = vperm.slane %v571, %v1019
        %v1042 = vperm.slane %v574, %v1019
        %v1043 = vperm.slane %v577, %v1019
        %v1044 = vperm.slane %v580, %v1019
        %v1045 = vperm.slane %v583, %v1019
        %v1046 = vperm.slane %v586, %v1019
        %v1047 = vperm.slane %v589, %v1019
        %v1048 = vperm.slane %v592, %v1019
        %v1049 = vperm.slane %v595, %v1019
        %v1050 = vperm.slane %v598, %v1019
        %v1051 = vperm.slane %v601, %v1019
        %v1052 = vperm.slane %v604, %v1019
        %v1053 = vperm.slane %v607, %v1019
        %v1054 = vperm.slane %v610, %v1019
        %v1055 = vperm.slane %v613, %v1019
        %v1056 = vperm.slane %v616, %v1019
        %v1057 = vperm.slane %v619, %v1019
        %v1058 = vperm.slane %v622, %v1019
        %v1059 = vperm.slane %v625, %v1019
        %v1060 = vperm.slane %v628, %v1019
        %v1061 = vperm.slane %v631, %v1019
        %v1062 = vperm.slane %v634, %v1019
        %v1063 = vperm.slane %v637, %v1019
        %v1064 = vperm.slane %v640, %v1019
        %v1065 = vperm.slane %v643, %v1019
        %v1066 = vperm.slane %v646, %v1019
        %v1067 = vperm.slane %v649, %v1019
        %v1068 = vperm.slane %v652, %v1019
        %v1069 = vperm.slane %v655, %v1019
        %v1070 = vperm.slane %v658, %v1019
        %v1071 = vperm.slane %v661, %v1019
        %v1072 = vperm.slane %v664, %v1019
        %v1073 = vperm.slane %v667, %v1019
        %v1074 = vperm.slane %v670, %v1019
        %v1075 = vperm.slane %v673, %v1019
        %v1076 = vperm.slane %v676, %v1019
        %v1077 = vperm.slane %v679, %v1019
        %v1078 = vperm.slane %v682, %v1019
        %v1079 = vperm.slane %v685, %v1019
        %v1080 = vperm.slane %v688, %v1019
        %v1081 = vperm.slane %v691, %v1019
        %v1082 = vperm.slane %v694, %v1019
        %v1083 = vperm.slane %v697, %v1019
        %v1084 = vperm.slane %v700, %v1019
        %v1085 = vperm.slane %v703, %v1019
        %v1086 = vperm.slane %v706, %v1019
        %v1087 = vperm.slane %v709, %v1019
        %v1088 = vperm.slane %v712, %v1019
        %v1089 = vperm.slane %v715, %v1019
        %v1090 = vperm.slane %v718, %v1019
        %v1091 = vperm.slane %v721, %v1019
        %v1092 = vperm.slane %v724, %v1019
        %v1093 = vperm.slane %v727, %v1019
        %v1094 = vperm.slane %v730, %v1019
        %v1095 = vperm.slane %v733, %v1019
        %v1096 = vperm.slane %v736, %v1019
        %v1097 = vperm.slane %v739, %v1019
        %v1098 = vperm.slane %v742, %v1019
        %v1099 = vperm.slane %v745, %v1019
        %v1100 = vperm.slane %v748, %v1019
        %v1101 = vperm.slane %v751, %v1019
        %v1102 = vperm.slane %v754, %v1019
        %v1103 = vperm.slane %v757, %v1019
        %v1104 = vperm.slane %v760, %v1019
        %v1105 = vperm.slane %v763, %v1019
        %v1106 = vperm.slane %v766, %v1019
        %v1107 = vperm.slane %v769, %v1019
        %v1108 = vperm.slane %v772, %v1019
        %v1109 = vperm.slane %v775, %v1019
        %v1110 = vperm.slane %v778, %v1019
        %v1111 = vperm.slane %v781, %v1019
        %v1112 = vperm.slane %v784, %v1019
        %v1113 = vperm.slane %v787, %v1019
        %v1114 = vperm.slane %v790, %v1019
        %v1115 = vperm.slane %v793, %v1019
        %v1116 = vperm.slane %v796, %v1019
        %v1117 = vperm.slane %v799, %v1019
        %v1118 = vperm.slane %v802, %v1019
        %v1119 = vperm.slane %v805, %v1019
        %v1120 = vperm.slane %v808, %v1019
        %v1121 = vperm.slane %v811, %v1019
        %v1122 = vperm.slane %v814, %v1019
        %v1123 = vperm.slane %v817, %v1019
        %v1124 = vperm.slane %v820, %v1019
        %v1125 = vperm.slane %v823, %v1019
        %v1126 = vperm.slane %v826, %v1019
        %v1127 = vperm.slane %v829, %v1019
        %v1128 = vperm.slane %v832, %v1019
        %v1129 = vperm.slane %v835, %v1019
        %v1130 = vperm.slane %v838, %v1019
        %v1131 = vperm.slane %v841, %v1019
        %v1132 = vperm.slane %v844, %v1019
        %v1133 = vperm.slane %v847, %v1019
        %v1134 = vperm.slane %v850, %v1019
        %v1135 = vperm.slane %v853, %v1019
        %v1136 = vperm.slane %v856, %v1019
        %v1137 = vperm.slane %v859, %v1019
        %v1138 = vperm.slane %v862, %v1019
        %v1139 = vperm.slane %v865, %v1019
        %v1140 = vperm.slane %v868, %v1019
        %v1141 = vperm.slane %v871, %v1019
        %v1142 = vperm.slane %v874, %v1019
        %v1143 = vperm.slane %v877, %v1019
        %v1144 = vperm.slane %v880, %v1019
        %v1145 = vperm.slane %v883, %v1019
        %v1146 = vperm.slane %v886, %v1019
        %v1147 = vperm.slane %v889, %v1019
        %vm1148 = vcmask 1041409
        %v1149 = vsel %vm1148, %v1021, %v1020
        %vm1150 = vcmask 1042434
        %v1151 = vsel %vm1150, %v1022, %v1149
        %vm1152 = vcmask 1043459
        %v1153 = vsel %vm1152, %v1023, %v1151
        %vm1154 = vcmask 1044484
        %v1155 = vsel %vm1154, %v1024, %v1153
        %vm1156 = vcmask 1045509
        %v1157 = vsel %vm1156, %v1025, %v1155
        %vm1158 = vcmask 1046534
        %v1159 = vsel %vm1158, %v1026, %v1157
        %vm1160 = vcmask 1047559
        %v1161 = vsel %vm1160, %v1027, %v1159
        %v1162 = vsel %vm1148, %v1029, %v1028
        %v1163 = vsel %vm1150, %v1030, %v1162
        %v1164 = vsel %vm1152, %v1031, %v1163
        %v1165 = vsel %vm1154, %v1032, %v1164
        %v1166 = vsel %vm1156, %v1033, %v1165
        %v1167 = vsel %vm1158, %v1034, %v1166
        %v1168 = vsel %vm1160, %v1035, %v1167
        %v1169 = vsel %vm1148, %v1037, %v1036
        %v1170 = vsel %vm1150, %v1038, %v1169
        %v1171 = vsel %vm1152, %v1039, %v1170
        %v1172 = vsel %vm1154, %v1040, %v1171
        %v1173 = vsel %vm1156, %v1041, %v1172
        %v1174 = vsel %vm1158, %v1042, %v1173
        %v1175 = vsel %vm1160, %v1043, %v1174
        %v1176 = vsel %vm1148, %v1045, %v1044
        %v1177 = vsel %vm1150, %v1046, %v1176
        %v1178 = vsel %vm1152, %v1047, %v1177
        %v1179 = vsel %vm1154, %v1048, %v1178
        %v1180 = vsel %vm1156, %v1049, %v1179
        %v1181 = vsel %vm1158, %v1050, %v1180
        %v1182 = vsel %vm1160, %v1051, %v1181
        %v1183 = vsel %vm1148, %v1053, %v1052
        %v1184 = vsel %vm1150, %v1054, %v1183
        %v1185 = vsel %vm1152, %v1055, %v1184
        %v1186 = vsel %vm1154, %v1056, %v1185
        %v1187 = vsel %vm1156, %v1057, %v1186
        %v1188 = vsel %vm1158, %v1058, %v1187
        %v1189 = vsel %vm1160, %v1059, %v1188
        %v1190 = vsel %vm1148, %v1061, %v1060
        %v1191 = vsel %vm1150, %v1062, %v1190
        %v1192 = vsel %vm1152, %v1063, %v1191
        %v1193 = vsel %vm1154, %v1064, %v1192
        %v1194 = vsel %vm1156, %v1065, %v1193
        %v1195 = vsel %vm1158, %v1066, %v1194
        %v1196 = vsel %vm1160, %v1067, %v1195
        %v1197 = vsel %vm1148, %v1069, %v1068
        %v1198 = vsel %vm1150, %v1070, %v1197
        %v1199 = vsel %vm1152, %v1071, %v1198
        %v1200 = vsel %vm1154, %v1072, %v1199
        %v1201 = vsel %vm1156, %v1073, %v1200
        %v1202 = vsel %vm1158, %v1074, %v1201
        %v1203 = vsel %vm1160, %v1075, %v1202
        %v1204 = vsel %vm1148, %v1077, %v1076
        %v1205 = vsel %vm1150, %v1078, %v1204
        %v1206 = vsel %vm1152, %v1079, %v1205
        %v1207 = vsel %vm1154, %v1080, %v1206
        %v1208 = vsel %vm1156, %v1081, %v1207
        %v1209 = vsel %vm1158, %v1082, %v1208
        %v1210 = vsel %vm1160, %v1083, %v1209
        %v1211 = vsel %vm1148, %v1085, %v1084
        %v1212 = vsel %vm1150, %v1086, %v1211
        %v1213 = vsel %vm1152, %v1087, %v1212
        %v1214 = vsel %vm1154, %v1088, %v1213
        %v1215 = vsel %vm1156, %v1089, %v1214
        %v1216 = vsel %vm1158, %v1090, %v1215
        %v1217 = vsel %vm1160, %v1091, %v1216
        %v1218 = vsel %vm1148, %v1093, %v1092
        %v1219 = vsel %vm1150, %v1094, %v1218
        %v1220 = vsel %vm1152, %v1095, %v1219
        %v1221 = vsel %vm1154, %v1096, %v1220
        %v1222 = vsel %vm1156, %v1097, %v1221
        %v1223 = vsel %vm1158, %v1098, %v1222
        %v1224 = vsel %vm1160, %v1099, %v1223
        %v1225 = vsel %vm1148, %v1101, %v1100
        %v1226 = vsel %vm1150, %v1102, %v1225
        %v1227 = vsel %vm1152, %v1103, %v1226
        %v1228 = vsel %vm1154, %v1104, %v1227
        %v1229 = vsel %vm1156, %v1105, %v1228
        %v1230 = vsel %vm1158, %v1106, %v1229
        %v1231 = vsel %vm1160, %v1107, %v1230
        %v1232 = vsel %vm1148, %v1109, %v1108
        %v1233 = vsel %vm1150, %v1110, %v1232
        %v1234 = vsel %vm1152, %v1111, %v1233
        %v1235 = vsel %vm1154, %v1112, %v1234
        %v1236 = vsel %vm1156, %v1113, %v1235
        %v1237 = vsel %vm1158, %v1114, %v1236
        %v1238 = vsel %vm1160, %v1115, %v1237
        %v1239 = vsel %vm1148, %v1117, %v1116
        %v1240 = vsel %vm1150, %v1118, %v1239
        %v1241 = vsel %vm1152, %v1119, %v1240
        %v1242 = vsel %vm1154, %v1120, %v1241
        %v1243 = vsel %vm1156, %v1121, %v1242
        %v1244 = vsel %vm1158, %v1122, %v1243
        %v1245 = vsel %vm1160, %v1123, %v1244
        %v1246 = vsel %vm1148, %v1125, %v1124
        %v1247 = vsel %vm1150, %v1126, %v1246
        %v1248 = vsel %vm1152, %v1127, %v1247
        %v1249 = vsel %vm1154, %v1128, %v1248
        %v1250 = vsel %vm1156, %v1129, %v1249
        %v1251 = vsel %vm1158, %v1130, %v1250
        %v1252 = vsel %vm1160, %v1131, %v1251
        %v1253 = vsel %vm1148, %v1133, %v1132
        %v1254 = vsel %vm1150, %v1134, %v1253
        %v1255 = vsel %vm1152, %v1135, %v1254
        %v1256 = vsel %vm1154, %v1136, %v1255
        %v1257 = vsel %vm1156, %v1137, %v1256
        %v1258 = vsel %vm1158, %v1138, %v1257
        %v1259 = vsel %vm1160, %v1139, %v1258
        %v1260 = vsel %vm1148, %v1141, %v1140
        %v1261 = vsel %vm1150, %v1142, %v1260
        %v1262 = vsel %vm1152, %v1143, %v1261
        %v1263 = vsel %vm1154, %v1144, %v1262
        %v1264 = vsel %vm1156, %v1145, %v1263
        %v1265 = vsel %vm1158, %v1146, %v1264
        %v1266 = vsel %vm1160, %v1147, %v1265
        %v1283 = vadd.f32 %v361, %v1161
        %v1284 = vadd.f32 %v362, %v1168
        %v1285 = vadd.f32 %v363, %v1175
        %v1286 = vadd.f32 %v364, %v1182
        %v1287 = vadd.f32 %v365, %v1189
        %v1288 = vadd.f32 %v366, %v1196
        %v1289 = vadd.f32 %v367, %v1203
        %v1290 = vadd.f32 %v368, %v1210
        %v1291 = vadd.f32 %v369, %v1217
        %v1292 = vadd.f32 %v370, %v1224
        %v1293 = vadd.f32 %v371, %v1231
        %v1294 = vadd.f32 %v372, %v1238
        %v1295 = vadd.f32 %v373, %v1245
        %v1296 = vadd.f32 %v374, %v1252
        %v1297 = vadd.f32 %v375, %v1259
        %v1298 = vadd.f32 %v376, %v1266
        %vm1299 = vcmask 31744
        %1300 = vst.msk [vmem:[#allocation2] sm:$0xff] %vm1299, %v1283
        %1301 = vst.msk [vmem:[#allocation2 + $0x8] sm:$0xff] %vm1299, %v1284
        %1302 = vst.msk [vmem:[#allocation2 + $0x10] sm:$0xff] %vm1299, %v1285
        %1303 = vst.msk [vmem:[#allocation2 + $0x18] sm:$0xff] %vm1299, %v1286
        %1304 = vst.msk [vmem:[#allocation2 + $0x20] sm:$0xff] %vm1299, %v1287
        %1305 = vst.msk [vmem:[#allocation2 + $0x28] sm:$0xff] %vm1299, %v1288
        %1306 = vst.msk [vmem:[#allocation2 + $0x30] sm:$0xff] %vm1299, %v1289
        %1307 = vst.msk [vmem:[#allocation2 + $0x38] sm:$0xff] %vm1299, %v1290
        %1308 = vst.msk [vmem:[#allocation2 + $0x40] sm:$0xff] %vm1299, %v1291
        %1309 = vst.msk [vmem:[#allocation2 + $0x48] sm:$0xff] %vm1299, %v1292
        %1310 = vst.msk [vmem:[#allocation2 + $0x50] sm:$0xff] %vm1299, %v1293
        %1311 = vst.msk [vmem:[#allocation2 + $0x58] sm:$0xff] %vm1299, %v1294
        %1312 = vst.msk [vmem:[#allocation2 + $0x60] sm:$0xff] %vm1299, %v1295
        %1313 = vst.msk [vmem:[#allocation2 + $0x68] sm:$0xff] %vm1299, %v1296
        %1314 = vst.msk [vmem:[#allocation2 + $0x70] sm:$0xff] %vm1299, %v1297
        %1315 = vst.msk [vmem:[#allocation2 + $0x78] sm:$0xff] %vm1299, %v1298
        %p1316 = scmp.eq.s32.totalorder %s30, 1
        // Predicated region
        $region61: #{tpu_custom_call.1} parent=51 // pred_check
          %p1317 = pneg %p1316
        $region62: #{tpu_custom_call.1} parent=51 // pred_check_branch
          %1319 = sbr.rel (%p1317) target = $region64
        $region63: #{tpu_custom_call.1} parent=51 // pred_region
          %v1320 = vld [vmem:[#allocation2] sm:$0xff]
          %v1321 = vld [vmem:[#allocation2 + $0x8] sm:$0xff]
          %v1322 = vld [vmem:[#allocation2 + $0x10] sm:$0xff]
          %v1323 = vld [vmem:[#allocation2 + $0x18] sm:$0xff]
          %v1324 = vld [vmem:[#allocation2 + $0x20] sm:$0xff]
          %v1325 = vld [vmem:[#allocation2 + $0x28] sm:$0xff]
          %v1326 = vld [vmem:[#allocation2 + $0x30] sm:$0xff]
          %v1327 = vld [vmem:[#allocation2 + $0x38] sm:$0xff]
          %v1328 = vld [vmem:[#allocation2 + $0x40] sm:$0xff]
          %v1329 = vld [vmem:[#allocation2 + $0x48] sm:$0xff]
          %v1330 = vld [vmem:[#allocation2 + $0x50] sm:$0xff]
          %v1331 = vld [vmem:[#allocation2 + $0x58] sm:$0xff]
          %v1332 = vld [vmem:[#allocation2 + $0x60] sm:$0xff]
          %v1333 = vld [vmem:[#allocation2 + $0x68] sm:$0xff]
          %v1334 = vld [vmem:[#allocation2 + $0x70] sm:$0xff]
          %v1335 = vld [vmem:[#allocation2 + $0x78] sm:$0xff]
          %v1336 = vmul.f32 %v1320, 0.00390625
          %v1337 = vmul.f32 %v1321, 0.00390625
          %v1338 = vmul.f32 %v1322, 0.00390625
          %v1339 = vmul.f32 %v1323, 0.00390625
          %v1340 = vmul.f32 %v1324, 0.00390625
          %v1341 = vmul.f32 %v1325, 0.00390625
          %v1342 = vmul.f32 %v1326, 0.00390625
          %v1343 = vmul.f32 %v1327, 0.00390625
          %v1344 = vmul.f32 %v1328, 0.00390625
          %v1345 = vmul.f32 %v1329, 0.00390625
          %v1346 = vmul.f32 %v1330, 0.00390625
          %v1347 = vmul.f32 %v1331, 0.00390625
          %v1348 = vmul.f32 %v1332, 0.00390625
          %v1349 = vmul.f32 %v1333, 0.00390625
          %v1350 = vmul.f32 %v1334, 0.00390625
          %v1351 = vmul.f32 %v1335, 0.00390625
          %v1352 = vpack.c.bf16 %v1337, %v1336
          %v1353 = vpack.c.bf16 %v1339, %v1338
          %v1354 = vpack.c.bf16 %v1341, %v1340
          %v1355 = vpack.c.bf16 %v1343, %v1342
          %v1356 = vpack.c.bf16 %v1345, %v1344
          %v1357 = vpack.c.bf16 %v1347, %v1346
          %v1358 = vpack.c.bf16 %v1349, %v1348
          %v1359 = vpack.c.bf16 %v1351, %v1350
          %v1360 = vld [vmem:[%s4] sm:$0x3]
          %v1361 = vld [vmem:[%s5] sm:$0x1]
          %v1363 = vperm.slane %v1361, 0
          %v1366 = vsel %vm1299, %v1352, 0
          %v1369 = vsel %vm1299, %v1353, 0
          %v1372 = vsel %vm1299, %v1354, 0
          %v1375 = vsel %vm1299, %v1355, 0
          %v1378 = vsel %vm1299, %v1356, 0
          %v1381 = vsel %vm1299, %v1357, 0
          %v1384 = vsel %vm1299, %v1358, 0
          %v1387 = vsel %vm1299, %v1359, 0
          %vm1389 = vcmask 1041408
          %v1391 = vsel %vm1389, %v1360, 0
          %1393 = vmatpush.bf16.msra.mxu0 0
          %1394 = vmatpush.bf16.msra.mxu0 0
          %1395 = vmatpush.bf16.msra.mxu0 0
          %1396 = vmatpush.bf16.msra.mxu0 0
          %1397 = vmatpush.bf16.msra.mxu0 0
          %1398 = vmatpush.bf16.msra.mxu0 0
          %1399 = vmatpush.bf16.msra.mxu0 0
          %1400 = vmatpush.bf16.msra.mxu0 %v1391
          %1401 = vmatmul.bf16.gmra.mxu0 %v1366
          %v1402 = vpop.f32.mrf.mxu0
          %v1403 = vadd.f32 %v1363, %v1402
          %v1404 = vpop.f32.mrf.mxu0
          %v1405 = vadd.f32 %v1363, %v1404
          %1406 = vmatmul.bf16.gmra.mxu0 %v1369
          %v1407 = vpop.f32.mrf.mxu0
          %v1408 = vadd.f32 %v1363, %v1407
          %v1409 = vpop.f32.mrf.mxu0
          %v1410 = vadd.f32 %v1363, %v1409
          %1411 = vmatmul.bf16.gmra.mxu0 %v1372
          %v1412 = vpop.f32.mrf.mxu0
          %v1413 = vadd.f32 %v1363, %v1412
          %v1414 = vpop.f32.mrf.mxu0
          %v1415 = vadd.f32 %v1363, %v1414
          %1416 = vmatmul.bf16.gmra.mxu0 %v1375
          %v1417 = vpop.f32.mrf.mxu0
          %v1418 = vadd.f32 %v1363, %v1417
          %v1419 = vpop.f32.mrf.mxu0
          %v1420 = vadd.f32 %v1363, %v1419
          %1421 = vmatmul.bf16.gmra.mxu0 %v1378
          %v1422 = vpop.f32.mrf.mxu0
          %v1423 = vadd.f32 %v1363, %v1422
          %v1424 = vpop.f32.mrf.mxu0
          %v1425 = vadd.f32 %v1363, %v1424
          %1426 = vmatmul.bf16.gmra.mxu0 %v1381
          %v1427 = vpop.f32.mrf.mxu0
          %v1428 = vadd.f32 %v1363, %v1427
          %v1429 = vpop.f32.mrf.mxu0
          %v1430 = vadd.f32 %v1363, %v1429
          %1431 = vmatmul.bf16.gmra.mxu0 %v1384
          %v1432 = vpop.f32.mrf.mxu0
          %v1433 = vadd.f32 %v1363, %v1432
          %v1434 = vpop.f32.mrf.mxu0
          %v1435 = vadd.f32 %v1363, %v1434
          %1436 = vmatmul.bf16.gmra.mxu0 %v1387
          %v1437 = vpop.f32.mrf.mxu0
          %v1438 = vadd.f32 %v1363, %v1437
          %v1439 = vpop.f32.mrf.mxu0
          %v1440 = vadd.f32 %v1363, %v1439
          %1441 = vdwg.mxu0
          %v1442 = vmul.f32 %v1403, %v1403
          %v1443 = vmul.f32 %v1405, %v1405
          %v1444 = vmul.f32 %v1408, %v1408
          %v1445 = vmul.f32 %v1410, %v1410
          %v1446 = vmul.f32 %v1413, %v1413
          %v1447 = vmul.f32 %v1415, %v1415
          %v1448 = vmul.f32 %v1418, %v1418
          %v1449 = vmul.f32 %v1420, %v1420
          %v1450 = vmul.f32 %v1423, %v1423
          %v1451 = vmul.f32 %v1425, %v1425
          %v1452 = vmul.f32 %v1428, %v1428
          %v1453 = vmul.f32 %v1430, %v1430
          %v1454 = vmul.f32 %v1433, %v1433
          %v1455 = vmul.f32 %v1435, %v1435
          %v1456 = vmul.f32 %v1438, %v1438
          %v1457 = vmul.f32 %v1440, %v1440
          %1458 = vadd.xlane.f32.xlu0 %v1442
          %v1459 = vpop.xlane.xlu0 %1458
          %1460 = vadd.xlane.f32.xlu0 %v1443
          %v1461 = vpop.xlane.xlu0 %1460
          %1462 = vadd.xlane.f32.xlu0 %v1444
          %v1463 = vpop.xlane.xlu0 %1462
          %1464 = vadd.xlane.f32.xlu0 %v1445
          %v1465 = vpop.xlane.xlu0 %1464
          %1466 = vadd.xlane.f32.xlu0 %v1446
          %v1467 = vpop.xlane.xlu0 %1466
          %1468 = vadd.xlane.f32.xlu0 %v1447
          %v1469 = vpop.xlane.xlu0 %1468
          %1470 = vadd.xlane.f32.xlu0 %v1448
          %v1471 = vpop.xlane.xlu0 %1470
          %1472 = vadd.xlane.f32.xlu0 %v1449
          %v1473 = vpop.xlane.xlu0 %1472
          %1474 = vadd.xlane.f32.xlu0 %v1450
          %v1475 = vpop.xlane.xlu0 %1474
          %1476 = vadd.xlane.f32.xlu0 %v1451
          %v1477 = vpop.xlane.xlu0 %1476
          %1478 = vadd.xlane.f32.xlu0 %v1452
          %v1479 = vpop.xlane.xlu0 %1478
          %1480 = vadd.xlane.f32.xlu0 %v1453
          %v1481 = vpop.xlane.xlu0 %1480
          %1482 = vadd.xlane.f32.xlu0 %v1454
          %v1483 = vpop.xlane.xlu0 %1482
          %1484 = vadd.xlane.f32.xlu0 %v1455
          %v1485 = vpop.xlane.xlu0 %1484
          %1486 = vadd.xlane.f32.xlu0 %v1456
          %v1487 = vpop.xlane.xlu0 %1486
          %1488 = vadd.xlane.f32.xlu0 %v1457
          %v1489 = vpop.xlane.xlu0 %1488
          %v1490 = vmax.f32 %v1459, 1e-30
          %v1491 = vmax.f32 %v1461, 1e-30
          %v1492 = vmax.f32 %v1463, 1e-30
          %v1493 = vmax.f32 %v1465, 1e-30
          %v1494 = vmax.f32 %v1467, 1e-30
          %v1495 = vmax.f32 %v1469, 1e-30
          %v1496 = vmax.f32 %v1471, 1e-30
          %v1497 = vmax.f32 %v1473, 1e-30
          %v1498 = vmax.f32 %v1475, 1e-30
          %v1499 = vmax.f32 %v1477, 1e-30
          %v1500 = vmax.f32 %v1479, 1e-30
          %v1501 = vmax.f32 %v1481, 1e-30
          %v1502 = vmax.f32 %v1483, 1e-30
          %v1503 = vmax.f32 %v1485, 1e-30
          %v1504 = vmax.f32 %v1487, 1e-30
          %v1505 = vmax.f32 %v1489, 1e-30
          %v1506 = vrsqrt.pop %v1490
          %v1507 = vmul.f32 %v1506, %v1490
          %v1508 = vmul.f32 %v1507, %v1506
          %v1509 = vmul.f32 0.5, %v1508
          %v1510 = vsub.f32 1.5, %v1509
          %v1511 = vmul.f32 %v1506, %v1510
          %vm1512 = vweird.f32 %v1490
          %vm1513 = vweird.f32 %v1506
          %vm1514 = vmor %vm1512, %vm1513
          %v1515 = vsel %vm1514, %v1506, %v1511
          %v1516 = vrsqrt.pop %v1491
          %v1517 = vmul.f32 %v1516, %v1491
          %v1518 = vmul.f32 %v1517, %v1516
          %v1519 = vmul.f32 0.5, %v1518
          %v1520 = vsub.f32 1.5, %v1519
          %v1521 = vmul.f32 %v1516, %v1520
          %vm1522 = vweird.f32 %v1491
          %vm1523 = vweird.f32 %v1516
          %vm1524 = vmor %vm1522, %vm1523
          %v1525 = vsel %vm1524, %v1516, %v1521
          %v1526 = vrsqrt.pop %v1492
          %v1527 = vmul.f32 %v1526, %v1492
          %v1528 = vmul.f32 %v1527, %v1526
          %v1529 = vmul.f32 0.5, %v1528
          %v1530 = vsub.f32 1.5, %v1529
          %v1531 = vmul.f32 %v1526, %v1530
          %vm1532 = vweird.f32 %v1492
          %vm1533 = vweird.f32 %v1526
          %vm1534 = vmor %vm1532, %vm1533
          %v1535 = vsel %vm1534, %v1526, %v1531
          %v1536 = vrsqrt.pop %v1493
          %v1537 = vmul.f32 %v1536, %v1493
          %v1538 = vmul.f32 %v1537, %v1536
          %v1539 = vmul.f32 0.5, %v1538
          %v1540 = vsub.f32 1.5, %v1539
          %v1541 = vmul.f32 %v1536, %v1540
          %vm1542 = vweird.f32 %v1493
          %vm1543 = vweird.f32 %v1536
          %vm1544 = vmor %vm1542, %vm1543
          %v1545 = vsel %vm1544, %v1536, %v1541
          %v1546 = vrsqrt.pop %v1494
          %v1547 = vmul.f32 %v1546, %v1494
          %v1548 = vmul.f32 %v1547, %v1546
          %v1549 = vmul.f32 0.5, %v1548
          %v1550 = vsub.f32 1.5, %v1549
          %v1551 = vmul.f32 %v1546, %v1550
          %vm1552 = vweird.f32 %v1494
          %vm1553 = vweird.f32 %v1546
          %vm1554 = vmor %vm1552, %vm1553
          %v1555 = vsel %vm1554, %v1546, %v1551
          %v1556 = vrsqrt.pop %v1495
          %v1557 = vmul.f32 %v1556, %v1495
          %v1558 = vmul.f32 %v1557, %v1556
          %v1559 = vmul.f32 0.5, %v1558
          %v1560 = vsub.f32 1.5, %v1559
          %v1561 = vmul.f32 %v1556, %v1560
          %vm1562 = vweird.f32 %v1495
          %vm1563 = vweird.f32 %v1556
          %vm1564 = vmor %vm1562, %vm1563
          %v1565 = vsel %vm1564, %v1556, %v1561
          %v1566 = vrsqrt.pop %v1496
          %v1567 = vmul.f32 %v1566, %v1496
          %v1568 = vmul.f32 %v1567, %v1566
          %v1569 = vmul.f32 0.5, %v1568
          %v1570 = vsub.f32 1.5, %v1569
          %v1571 = vmul.f32 %v1566, %v1570
          %vm1572 = vweird.f32 %v1496
          %vm1573 = vweird.f32 %v1566
          %vm1574 = vmor %vm1572, %vm1573
          %v1575 = vsel %vm1574, %v1566, %v1571
          %v1576 = vrsqrt.pop %v1497
          %v1577 = vmul.f32 %v1576, %v1497
          %v1578 = vmul.f32 %v1577, %v1576
          %v1579 = vmul.f32 0.5, %v1578
          %v1580 = vsub.f32 1.5, %v1579
          %v1581 = vmul.f32 %v1576, %v1580
          %vm1582 = vweird.f32 %v1497
          %vm1583 = vweird.f32 %v1576
          %vm1584 = vmor %vm1582, %vm1583
          %v1585 = vsel %vm1584, %v1576, %v1581
          %v1586 = vrsqrt.pop %v1498
          %v1587 = vmul.f32 %v1586, %v1498
          %v1588 = vmul.f32 %v1587, %v1586
          %v1589 = vmul.f32 0.5, %v1588
          %v1590 = vsub.f32 1.5, %v1589
          %v1591 = vmul.f32 %v1586, %v1590
          %vm1592 = vweird.f32 %v1498
          %vm1593 = vweird.f32 %v1586
          %vm1594 = vmor %vm1592, %vm1593
          %v1595 = vsel %vm1594, %v1586, %v1591
          %v1596 = vrsqrt.pop %v1499
          %v1597 = vmul.f32 %v1596, %v1499
          %v1598 = vmul.f32 %v1597, %v1596
          %v1599 = vmul.f32 0.5, %v1598
          %v1600 = vsub.f32 1.5, %v1599
          %v1601 = vmul.f32 %v1596, %v1600
          %vm1602 = vweird.f32 %v1499
          %vm1603 = vweird.f32 %v1596
          %vm1604 = vmor %vm1602, %vm1603
          %v1605 = vsel %vm1604, %v1596, %v1601
          %v1606 = vrsqrt.pop %v1500
          %v1607 = vmul.f32 %v1606, %v1500
          %v1608 = vmul.f32 %v1607, %v1606
          %v1609 = vmul.f32 0.5, %v1608
          %v1610 = vsub.f32 1.5, %v1609
          %v1611 = vmul.f32 %v1606, %v1610
          %vm1612 = vweird.f32 %v1500
          %vm1613 = vweird.f32 %v1606
          %vm1614 = vmor %vm1612, %vm1613
          %v1615 = vsel %vm1614, %v1606, %v1611
          %v1616 = vrsqrt.pop %v1501
          %v1617 = vmul.f32 %v1616, %v1501
          %v1618 = vmul.f32 %v1617, %v1616
          %v1619 = vmul.f32 0.5, %v1618
          %v1620 = vsub.f32 1.5, %v1619
          %v1621 = vmul.f32 %v1616, %v1620
          %vm1622 = vweird.f32 %v1501
          %vm1623 = vweird.f32 %v1616
          %vm1624 = vmor %vm1622, %vm1623
          %v1625 = vsel %vm1624, %v1616, %v1621
          %v1626 = vrsqrt.pop %v1502
          %v1627 = vmul.f32 %v1626, %v1502
          %v1628 = vmul.f32 %v1627, %v1626
          %v1629 = vmul.f32 0.5, %v1628
          %v1630 = vsub.f32 1.5, %v1629
          %v1631 = vmul.f32 %v1626, %v1630
          %vm1632 = vweird.f32 %v1502
          %vm1633 = vweird.f32 %v1626
          %vm1634 = vmor %vm1632, %vm1633
          %v1635 = vsel %vm1634, %v1626, %v1631
          %v1636 = vrsqrt.pop %v1503
          %v1637 = vmul.f32 %v1636, %v1503
          %v1638 = vmul.f32 %v1637, %v1636
          %v1639 = vmul.f32 0.5, %v1638
          %v1640 = vsub.f32 1.5, %v1639
          %v1641 = vmul.f32 %v1636, %v1640
          %vm1642 = vweird.f32 %v1503
          %vm1643 = vweird.f32 %v1636
          %vm1644 = vmor %vm1642, %vm1643
          %v1645 = vsel %vm1644, %v1636, %v1641
          %v1646 = vrsqrt.pop %v1504
          %v1647 = vmul.f32 %v1646, %v1504
          %v1648 = vmul.f32 %v1647, %v1646
          %v1649 = vmul.f32 0.5, %v1648
          %v1650 = vsub.f32 1.5, %v1649
          %v1651 = vmul.f32 %v1646, %v1650
          %vm1652 = vweird.f32 %v1504
          %vm1653 = vweird.f32 %v1646
          %vm1654 = vmor %vm1652, %vm1653
          %v1655 = vsel %vm1654, %v1646, %v1651
          %v1656 = vrsqrt.pop %v1505
          %v1657 = vmul.f32 %v1656, %v1505
          %v1658 = vmul.f32 %v1657, %v1656
          %v1659 = vmul.f32 0.5, %v1658
          %v1660 = vsub.f32 1.5, %v1659
          %v1661 = vmul.f32 %v1656, %v1660
          %vm1662 = vweird.f32 %v1505
          %vm1663 = vweird.f32 %v1656
          %vm1664 = vmor %vm1662, %vm1663
          %v1665 = vsel %vm1664, %v1656, %v1661
          %s1666 = sld [smem:[#allocation3]]
          %v1667 = vstv %s1666
          %v1668 = vmul.f32 %v1515, %v1667
          %v1669 = vmul.f32 %v1525, %v1667
          %v1670 = vmul.f32 %v1535, %v1667
          %v1671 = vmul.f32 %v1545, %v1667
          %v1672 = vmul.f32 %v1555, %v1667
          %v1673 = vmul.f32 %v1565, %v1667
          %v1674 = vmul.f32 %v1575, %v1667
          %v1675 = vmul.f32 %v1585, %v1667
          %v1676 = vmul.f32 %v1595, %v1667
          %v1677 = vmul.f32 %v1605, %v1667
          %v1678 = vmul.f32 %v1615, %v1667
          %v1679 = vmul.f32 %v1625, %v1667
          %v1680 = vmul.f32 %v1635, %v1667
          %v1681 = vmul.f32 %v1645, %v1667
          %v1682 = vmul.f32 %v1655, %v1667
          %v1683 = vmul.f32 %v1665, %v1667
          %v1684 = vmul.f32 %v1403, %v1668
          %v1685 = vmul.f32 %v1405, %v1669
          %v1686 = vmul.f32 %v1408, %v1670
          %v1687 = vmul.f32 %v1410, %v1671
          %v1688 = vmul.f32 %v1413, %v1672
          %v1689 = vmul.f32 %v1415, %v1673
          %v1690 = vmul.f32 %v1418, %v1674
          %v1691 = vmul.f32 %v1420, %v1675
          %v1692 = vmul.f32 %v1423, %v1676
          %v1693 = vmul.f32 %v1425, %v1677
          %v1694 = vmul.f32 %v1428, %v1678
          %v1695 = vmul.f32 %v1430, %v1679
          %v1696 = vmul.f32 %v1433, %v1680
          %v1697 = vmul.f32 %v1435, %v1681
          %v1698 = vmul.f32 %v1438, %v1682
          %v1699 = vmul.f32 %v1440, %v1683
          %v1700 = vld [vmem:[%s3] sm:$0xff]
          %v1701 = vld [vmem:[%s3 + $0x8] sm:$0xff]
          %v1702 = vld [vmem:[%s3 + $0x10] sm:$0xff]
          %v1703 = vld [vmem:[%s3 + $0x18] sm:$0xff]
          %v1704 = vld [vmem:[%s3 + $0x20] sm:$0xff]
          %v1705 = vld [vmem:[%s3 + $0x28] sm:$0xff]
          %v1706 = vld [vmem:[%s3 + $0x30] sm:$0xff]
          %v1707 = vld [vmem:[%s3 + $0x38] sm:$0xff]
          %v1708 = vld [vmem:[%s3 + $0x40] sm:$0xff]
          %v1709 = vld [vmem:[%s3 + $0x48] sm:$0xff]
          %v1710 = vld [vmem:[%s3 + $0x50] sm:$0xff]
          %v1711 = vld [vmem:[%s3 + $0x58] sm:$0xff]
          %v1712 = vld [vmem:[%s3 + $0x60] sm:$0xff]
          %v1713 = vld [vmem:[%s3 + $0x68] sm:$0xff]
          %v1714 = vld [vmem:[%s3 + $0x70] sm:$0xff]
          %v1715 = vld [vmem:[%s3 + $0x78] sm:$0xff]
          %v1716 = vpack.c.bf16 %v1701, %v1700
          %v1717 = vpack.c.bf16 %v1703, %v1702
          %v1718 = vpack.c.bf16 %v1705, %v1704
          %v1719 = vpack.c.bf16 %v1707, %v1706
          %v1720 = vpack.c.bf16 %v1709, %v1708
          %v1721 = vpack.c.bf16 %v1711, %v1710
          %v1722 = vpack.c.bf16 %v1713, %v1712
          %v1723 = vpack.c.bf16 %v1715, %v1714
          %v1724 = vld [vmem:[%s6] sm:$0xf]
          %v1725 = vld [vmem:[%s6 + $0x4] sm:$0xf]
          %v1726 = vld [vmem:[%s6 + $0x8] sm:$0xf]
          %v1727 = vld [vmem:[%s6 + $0xc] sm:$0xf]
          %v1728 = vld [vmem:[%s7] sm:$0x1]
          %v1730 = vperm.slane %v1728, 0
          %v1736 = vunpack.c.l.b16 %v1724
          %v1737 = vunpack.c.l.b16 %v1725
          %v1738 = vunpack.c.l.b16 %v1726
          %v1739 = vunpack.c.l.b16 %v1727
          %v1740 = vpack.c.b16 %v1737, %v1736
          %v1741 = vpack.c.b16 %v1739, %v1738
          %vm1744 = vcmask 261120
          %v1746 = vsel %vm1744, %v1716, 0
          %v1749 = vsel %vm1744, %v1717, 0
          %v1752 = vsel %vm1744, %v1718, 0
          %v1755 = vsel %vm1744, %v1719, 0
          %v1758 = vsel %vm1744, %v1720, 0
          %v1761 = vsel %vm1744, %v1721, 0
          %v1764 = vsel %vm1744, %v1722, 0
          %v1767 = vsel %vm1744, %v1723, 0
          %1769 = vmatpush.bf16.msra.mxu0 0
          %1770 = vmatpush.bf16.msra.mxu0 0
          %1771 = vmatpush.bf16.msra.mxu0 0
          %1772 = vmatpush.bf16.msra.mxu0 0
          %1773 = vmatpush.bf16.msra.mxu0 0
          %1774 = vmatpush.bf16.msra.mxu0 0
          %1775 = vmatpush.bf16.msra.mxu0 %v1741
          %1776 = vmatpush.bf16.msra.mxu0 %v1740
          %1777 = vmatmul.bf16.gmra.mxu0 %v1746
          %v1778 = vpop.f32.mrf.mxu0
          %v1779 = vadd.f32 %v1730, %v1778
          %v1780 = vpop.f32.mrf.mxu0
          %v1781 = vadd.f32 %v1730, %v1780
          %1782 = vmatmul.bf16.gmra.mxu0 %v1749
          %v1783 = vpop.f32.mrf.mxu0
          %v1784 = vadd.f32 %v1730, %v1783
          %v1785 = vpop.f32.mrf.mxu0
          %v1786 = vadd.f32 %v1730, %v1785
          %1787 = vmatmul.bf16.gmra.mxu0 %v1752
          %v1788 = vpop.f32.mrf.mxu0
          %v1789 = vadd.f32 %v1730, %v1788
          %v1790 = vpop.f32.mrf.mxu0
          %v1791 = vadd.f32 %v1730, %v1790
          %1792 = vmatmul.bf16.gmra.mxu0 %v1755
          %v1793 = vpop.f32.mrf.mxu0
          %v1794 = vadd.f32 %v1730, %v1793
          %v1795 = vpop.f32.mrf.mxu0
          %v1796 = vadd.f32 %v1730, %v1795
          %1797 = vmatmul.bf16.gmra.mxu0 %v1758
          %v1798 = vpop.f32.mrf.mxu0
          %v1799 = vadd.f32 %v1730, %v1798
          %v1800 = vpop.f32.mrf.mxu0
          %v1801 = vadd.f32 %v1730, %v1800
          %1802 = vmatmul.bf16.gmra.mxu0 %v1761
          %v1803 = vpop.f32.mrf.mxu0
          %v1804 = vadd.f32 %v1730, %v1803
          %v1805 = vpop.f32.mrf.mxu0
          %v1806 = vadd.f32 %v1730, %v1805
          %1807 = vmatmul.bf16.gmra.mxu0 %v1764
          %v1808 = vpop.f32.mrf.mxu0
          %v1809 = vadd.f32 %v1730, %v1808
          %v1810 = vpop.f32.mrf.mxu0
          %v1811 = vadd.f32 %v1730, %v1810
          %1812 = vmatmul.bf16.gmra.mxu0 %v1767
          %v1813 = vpop.f32.mrf.mxu0
          %v1814 = vadd.f32 %v1730, %v1813
          %v1815 = vpop.f32.mrf.mxu0
          %v1816 = vadd.f32 %v1730, %v1815
          %1817 = vdwg.mxu0
          %v1818 = vmul.f32 %v1779, %v1779
          %v1819 = vmul.f32 %v1781, %v1781
          %v1820 = vmul.f32 %v1784, %v1784
          %v1821 = vmul.f32 %v1786, %v1786
          %v1822 = vmul.f32 %v1789, %v1789
          %v1823 = vmul.f32 %v1791, %v1791
          %v1824 = vmul.f32 %v1794, %v1794
          %v1825 = vmul.f32 %v1796, %v1796
          %v1826 = vmul.f32 %v1799, %v1799
          %v1827 = vmul.f32 %v1801, %v1801
          %v1828 = vmul.f32 %v1804, %v1804
          %v1829 = vmul.f32 %v1806, %v1806
          %v1830 = vmul.f32 %v1809, %v1809
          %v1831 = vmul.f32 %v1811, %v1811
          %v1832 = vmul.f32 %v1814, %v1814
          %v1833 = vmul.f32 %v1816, %v1816
          %1834 = vadd.xlane.f32.xlu0 %v1818
          %v1835 = vpop.xlane.xlu0 %1834
          %1836 = vadd.xlane.f32.xlu0 %v1819
          %v1837 = vpop.xlane.xlu0 %1836
          %1838 = vadd.xlane.f32.xlu0 %v1820
          %v1839 = vpop.xlane.xlu0 %1838
          %1840 = vadd.xlane.f32.xlu0 %v1821
          %v1841 = vpop.xlane.xlu0 %1840
          %1842 = vadd.xlane.f32.xlu0 %v1822
          %v1843 = vpop.xlane.xlu0 %1842
          %1844 = vadd.xlane.f32.xlu0 %v1823
          %v1845 = vpop.xlane.xlu0 %1844
          %1846 = vadd.xlane.f32.xlu0 %v1824
          %v1847 = vpop.xlane.xlu0 %1846
          %1848 = vadd.xlane.f32.xlu0 %v1825
          %v1849 = vpop.xlane.xlu0 %1848
          %1850 = vadd.xlane.f32.xlu0 %v1826
          %v1851 = vpop.xlane.xlu0 %1850
          %1852 = vadd.xlane.f32.xlu0 %v1827
          %v1853 = vpop.xlane.xlu0 %1852
          %1854 = vadd.xlane.f32.xlu0 %v1828
          %v1855 = vpop.xlane.xlu0 %1854
          %1856 = vadd.xlane.f32.xlu0 %v1829
          %v1857 = vpop.xlane.xlu0 %1856
          %1858 = vadd.xlane.f32.xlu0 %v1830
          %v1859 = vpop.xlane.xlu0 %1858
          %1860 = vadd.xlane.f32.xlu0 %v1831
          %v1861 = vpop.xlane.xlu0 %1860
          %1862 = vadd.xlane.f32.xlu0 %v1832
          %v1863 = vpop.xlane.xlu0 %1862
          %1864 = vadd.xlane.f32.xlu0 %v1833
          %v1865 = vpop.xlane.xlu0 %1864
          %v1866 = vmax.f32 %v1835, 1e-30
          %v1867 = vmax.f32 %v1837, 1e-30
          %v1868 = vmax.f32 %v1839, 1e-30
          %v1869 = vmax.f32 %v1841, 1e-30
          %v1870 = vmax.f32 %v1843, 1e-30
          %v1871 = vmax.f32 %v1845, 1e-30
          %v1872 = vmax.f32 %v1847, 1e-30
          %v1873 = vmax.f32 %v1849, 1e-30
          %v1874 = vmax.f32 %v1851, 1e-30
          %v1875 = vmax.f32 %v1853, 1e-30
          %v1876 = vmax.f32 %v1855, 1e-30
          %v1877 = vmax.f32 %v1857, 1e-30
          %v1878 = vmax.f32 %v1859, 1e-30
          %v1879 = vmax.f32 %v1861, 1e-30
          %v1880 = vmax.f32 %v1863, 1e-30
          %v1881 = vmax.f32 %v1865, 1e-30
          %v1882 = vrsqrt.pop %v1866
          %v1883 = vmul.f32 %v1882, %v1866
          %v1884 = vmul.f32 %v1883, %v1882
          %v1885 = vmul.f32 0.5, %v1884
          %v1886 = vsub.f32 1.5, %v1885
          %v1887 = vmul.f32 %v1882, %v1886
          %vm1888 = vweird.f32 %v1866
          %vm1889 = vweird.f32 %v1882
          %vm1890 = vmor %vm1888, %vm1889
          %v1891 = vsel %vm1890, %v1882, %v1887
          %v1892 = vrsqrt.pop %v1867
          %v1893 = vmul.f32 %v1892, %v1867
          %v1894 = vmul.f32 %v1893, %v1892
          %v1895 = vmul.f32 0.5, %v1894
          %v1896 = vsub.f32 1.5, %v1895
          %v1897 = vmul.f32 %v1892, %v1896
          %vm1898 = vweird.f32 %v1867
          %vm1899 = vweird.f32 %v1892
          %vm1900 = vmor %vm1898, %vm1899
          %v1901 = vsel %vm1900, %v1892, %v1897
          %v1902 = vrsqrt.pop %v1868
          %v1903 = vmul.f32 %v1902, %v1868
          %v1904 = vmul.f32 %v1903, %v1902
          %v1905 = vmul.f32 0.5, %v1904
          %v1906 = vsub.f32 1.5, %v1905
          %v1907 = vmul.f32 %v1902, %v1906
          %vm1908 = vweird.f32 %v1868
          %vm1909 = vweird.f32 %v1902
          %vm1910 = vmor %vm1908, %vm1909
          %v1911 = vsel %vm1910, %v1902, %v1907
          %v1912 = vrsqrt.pop %v1869
          %v1913 = vmul.f32 %v1912, %v1869
          %v1914 = vmul.f32 %v1913, %v1912
          %v1915 = vmul.f32 0.5, %v1914
          %v1916 = vsub.f32 1.5, %v1915
          %v1917 = vmul.f32 %v1912, %v1916
          %vm1918 = vweird.f32 %v1869
          %vm1919 = vweird.f32 %v1912
          %vm1920 = vmor %vm1918, %vm1919
          %v1921 = vsel %vm1920, %v1912, %v1917
          %v1922 = vrsqrt.pop %v1870
          %v1923 = vmul.f32 %v1922, %v1870
          %v1924 = vmul.f32 %v1923, %v1922
          %v1925 = vmul.f32 0.5, %v1924
          %v1926 = vsub.f32 1.5, %v1925
          %v1927 = vmul.f32 %v1922, %v1926
          %vm1928 = vweird.f32 %v1870
          %vm1929 = vweird.f32 %v1922
          %vm1930 = vmor %vm1928, %vm1929
          %v1931 = vsel %vm1930, %v1922, %v1927
          %v1932 = vrsqrt.pop %v1871
          %v1933 = vmul.f32 %v1932, %v1871
          %v1934 = vmul.f32 %v1933, %v1932
          %v1935 = vmul.f32 0.5, %v1934
          %v1936 = vsub.f32 1.5, %v1935
          %v1937 = vmul.f32 %v1932, %v1936
          %vm1938 = vweird.f32 %v1871
          %vm1939 = vweird.f32 %v1932
          %vm1940 = vmor %vm1938, %vm1939
          %v1941 = vsel %vm1940, %v1932, %v1937
          %v1942 = vrsqrt.pop %v1872
          %v1943 = vmul.f32 %v1942, %v1872
          %v1944 = vmul.f32 %v1943, %v1942
          %v1945 = vmul.f32 0.5, %v1944
          %v1946 = vsub.f32 1.5, %v1945
          %v1947 = vmul.f32 %v1942, %v1946
          %vm1948 = vweird.f32 %v1872
          %vm1949 = vweird.f32 %v1942
          %vm1950 = vmor %vm1948, %vm1949
          %v1951 = vsel %vm1950, %v1942, %v1947
          %v1952 = vrsqrt.pop %v1873
          %v1953 = vmul.f32 %v1952, %v1873
          %v1954 = vmul.f32 %v1953, %v1952
          %v1955 = vmul.f32 0.5, %v1954
          %v1956 = vsub.f32 1.5, %v1955
          %v1957 = vmul.f32 %v1952, %v1956
          %vm1958 = vweird.f32 %v1873
          %vm1959 = vweird.f32 %v1952
          %vm1960 = vmor %vm1958, %vm1959
          %v1961 = vsel %vm1960, %v1952, %v1957
          %v1962 = vrsqrt.pop %v1874
          %v1963 = vmul.f32 %v1962, %v1874
          %v1964 = vmul.f32 %v1963, %v1962
          %v1965 = vmul.f32 0.5, %v1964
          %v1966 = vsub.f32 1.5, %v1965
          %v1967 = vmul.f32 %v1962, %v1966
          %vm1968 = vweird.f32 %v1874
          %vm1969 = vweird.f32 %v1962
          %vm1970 = vmor %vm1968, %vm1969
          %v1971 = vsel %vm1970, %v1962, %v1967
          %v1972 = vrsqrt.pop %v1875
          %v1973 = vmul.f32 %v1972, %v1875
          %v1974 = vmul.f32 %v1973, %v1972
          %v1975 = vmul.f32 0.5, %v1974
          %v1976 = vsub.f32 1.5, %v1975
          %v1977 = vmul.f32 %v1972, %v1976
          %vm1978 = vweird.f32 %v1875
          %vm1979 = vweird.f32 %v1972
          %vm1980 = vmor %vm1978, %vm1979
          %v1981 = vsel %vm1980, %v1972, %v1977
          %v1982 = vrsqrt.pop %v1876
          %v1983 = vmul.f32 %v1982, %v1876
          %v1984 = vmul.f32 %v1983, %v1982
          %v1985 = vmul.f32 0.5, %v1984
          %v1986 = vsub.f32 1.5, %v1985
          %v1987 = vmul.f32 %v1982, %v1986
          %vm1988 = vweird.f32 %v1876
          %vm1989 = vweird.f32 %v1982
          %vm1990 = vmor %vm1988, %vm1989
          %v1991 = vsel %vm1990, %v1982, %v1987
          %v1992 = vrsqrt.pop %v1877
          %v1993 = vmul.f32 %v1992, %v1877
          %v1994 = vmul.f32 %v1993, %v1992
          %v1995 = vmul.f32 0.5, %v1994
          %v1996 = vsub.f32 1.5, %v1995
          %v1997 = vmul.f32 %v1992, %v1996
          %vm1998 = vweird.f32 %v1877
          %vm1999 = vweird.f32 %v1992
          %vm2000 = vmor %vm1998, %vm1999
          %v2001 = vsel %vm2000, %v1992, %v1997
          %v2002 = vrsqrt.pop %v1878
          %v2003 = vmul.f32 %v2002, %v1878
          %v2004 = vmul.f32 %v2003, %v2002
          %v2005 = vmul.f32 0.5, %v2004
          %v2006 = vsub.f32 1.5, %v2005
          %v2007 = vmul.f32 %v2002, %v2006
          %vm2008 = vweird.f32 %v1878
          %vm2009 = vweird.f32 %v2002
          %vm2010 = vmor %vm2008, %vm2009
          %v2011 = vsel %vm2010, %v2002, %v2007
          %v2012 = vrsqrt.pop %v1879
          %v2013 = vmul.f32 %v2012, %v1879
          %v2014 = vmul.f32 %v2013, %v2012
          %v2015 = vmul.f32 0.5, %v2014
          %v2016 = vsub.f32 1.5, %v2015
          %v2017 = vmul.f32 %v2012, %v2016
          %vm2018 = vweird.f32 %v1879
          %vm2019 = vweird.f32 %v2012
          %vm2020 = vmor %vm2018, %vm2019
          %v2021 = vsel %vm2020, %v2012, %v2017
          %v2022 = vrsqrt.pop %v1880
          %v2023 = vmul.f32 %v2022, %v1880
          %v2024 = vmul.f32 %v2023, %v2022
          %v2025 = vmul.f32 0.5, %v2024
          %v2026 = vsub.f32 1.5, %v2025
          %v2027 = vmul.f32 %v2022, %v2026
          %vm2028 = vweird.f32 %v1880
          %vm2029 = vweird.f32 %v2022
          %vm2030 = vmor %vm2028, %vm2029
          %v2031 = vsel %vm2030, %v2022, %v2027
          %v2032 = vrsqrt.pop %v1881
          %v2033 = vmul.f32 %v2032, %v1881
          %v2034 = vmul.f32 %v2033, %v2032
          %v2035 = vmul.f32 0.5, %v2034
          %v2036 = vsub.f32 1.5, %v2035
          %v2037 = vmul.f32 %v2032, %v2036
          %vm2038 = vweird.f32 %v1881
          %vm2039 = vweird.f32 %v2032
          %vm2040 = vmor %vm2038, %vm2039
          %v2041 = vsel %vm2040, %v2032, %v2037
          %v2042 = vmul.f32 %v1779, %v1891
          %v2043 = vmul.f32 %v1781, %v1901
          %v2044 = vmul.f32 %v1784, %v1911
          %v2045 = vmul.f32 %v1786, %v1921
          %v2046 = vmul.f32 %v1789, %v1931
          %v2047 = vmul.f32 %v1791, %v1941
          %v2048 = vmul.f32 %v1794, %v1951
          %v2049 = vmul.f32 %v1796, %v1961
          %v2050 = vmul.f32 %v1799, %v1971
          %v2051 = vmul.f32 %v1801, %v1981
          %v2052 = vmul.f32 %v1804, %v1991
          %v2053 = vmul.f32 %v1806, %v2001
          %v2054 = vmul.f32 %v1809, %v2011
          %v2055 = vmul.f32 %v1811, %v2021
          %v2056 = vmul.f32 %v1814, %v2031
          %v2057 = vmul.f32 %v1816, %v2041
          %v2058 = vpack.c.bf16 %v1685, %v1684
          %v2059 = vpack.c.bf16 %v1687, %v1686
          %v2060 = vpack.c.bf16 %v1689, %v1688
          %v2061 = vpack.c.bf16 %v1691, %v1690
          %v2062 = vpack.c.bf16 %v1693, %v1692
          %v2063 = vpack.c.bf16 %v1695, %v1694
          %v2064 = vpack.c.bf16 %v1697, %v1696
          %v2065 = vpack.c.bf16 %v1699, %v1698
          %v2066 = vpack.c.bf16 %v2043, %v2042
          %v2067 = vpack.c.bf16 %v2045, %v2044
          %v2068 = vpack.c.bf16 %v2047, %v2046
          %v2069 = vpack.c.bf16 %v2049, %v2048
          %v2070 = vpack.c.bf16 %v2051, %v2050
          %v2071 = vpack.c.bf16 %v2053, %v2052
          %v2072 = vpack.c.bf16 %v2055, %v2054
          %v2073 = vpack.c.bf16 %v2057, %v2056
          %s2074 = sld [smem:[#allocation4]]
          %v2075 = vstv %s2074
          %2076 = vmatpush.bf16.xpose.msra.mxu0 %v2073
          %2077 = vmatpush.bf16.xpose.msra.mxu0 %v2072
          %2078 = vmatpush.bf16.xpose.msra.mxu0 %v2071
          %2079 = vmatpush.bf16.xpose.msra.mxu0 %v2070
          %2080 = vmatpush.bf16.xpose.msra.mxu0 %v2069
          %2081 = vmatpush.bf16.xpose.msra.mxu0 %v2068
          %2082 = vmatpush.bf16.xpose.msra.mxu0 %v2067
          %2083 = vmatpush.bf16.xpose.msra.mxu0 %v2066
          %2084 = vmatmul.bf16.gmra.mxu0 %v2058
          %v2085 = vpop.f32.mrf.mxu0
          %v2086 = vadd.f32 %v2075, %v2085
          %v2087 = vpop.f32.mrf.mxu0
          %v2088 = vadd.f32 %v2075, %v2087
          %2089 = vmatmul.bf16.gmra.mxu0 %v2059
          %v2090 = vpop.f32.mrf.mxu0
          %v2091 = vadd.f32 %v2075, %v2090
          %v2092 = vpop.f32.mrf.mxu0
          %v2093 = vadd.f32 %v2075, %v2092
          %2094 = vmatmul.bf16.gmra.mxu0 %v2060
          %v2095 = vpop.f32.mrf.mxu0
          %v2096 = vadd.f32 %v2075, %v2095
          %v2097 = vpop.f32.mrf.mxu0
          %v2098 = vadd.f32 %v2075, %v2097
          %2099 = vmatmul.bf16.gmra.mxu0 %v2061
          %v2100 = vpop.f32.mrf.mxu0
          %v2101 = vadd.f32 %v2075, %v2100
          %v2102 = vpop.f32.mrf.mxu0
          %v2103 = vadd.f32 %v2075, %v2102
          %2104 = vmatmul.bf16.gmra.mxu0 %v2062
          %v2105 = vpop.f32.mrf.mxu0
          %v2106 = vadd.f32 %v2075, %v2105
          %v2107 = vpop.f32.mrf.mxu0
          %v2108 = vadd.f32 %v2075, %v2107
          %2109 = vmatmul.bf16.gmra.mxu0 %v2063
          %v2110 = vpop.f32.mrf.mxu0
          %v2111 = vadd.f32 %v2075, %v2110
          %v2112 = vpop.f32.mrf.mxu0
          %v2113 = vadd.f32 %v2075, %v2112
          %2114 = vmatmul.bf16.gmra.mxu0 %v2064
          %v2115 = vpop.f32.mrf.mxu0
          %v2116 = vadd.f32 %v2075, %v2115
          %v2117 = vpop.f32.mrf.mxu0
          %v2118 = vadd.f32 %v2075, %v2117
          %2119 = vmatmul.bf16.gmra.mxu0 %v2065
          %v2120 = vpop.f32.mrf.mxu0
          %v2121 = vadd.f32 %v2075, %v2120
          %v2122 = vpop.f32.mrf.mxu0
          %v2123 = vadd.f32 %v2075, %v2122
          %2124 = vdwg.mxu0
          %2125 = vst [vmem:[#allocation8] sm:$0xff] %v2086
          %2126 = vst [vmem:[#allocation8 + $0x8] sm:$0xff] %v2088
          %2127 = vst [vmem:[#allocation8 + $0x10] sm:$0xff] %v2091
          %2128 = vst [vmem:[#allocation8 + $0x18] sm:$0xff] %v2093
          %2129 = vst [vmem:[#allocation8 + $0x20] sm:$0xff] %v2096
          %2130 = vst [vmem:[#allocation8 + $0x28] sm:$0xff] %v2098
          %2131 = vst [vmem:[#allocation8 + $0x30] sm:$0xff] %v2101
          %2132 = vst [vmem:[#allocation8 + $0x38] sm:$0xff] %v2103
          %2133 = vst [vmem:[#allocation8 + $0x40] sm:$0xff] %v2106
          %2134 = vst [vmem:[#allocation8 + $0x48] sm:$0xff] %v2108
          %2135 = vst [vmem:[#allocation8 + $0x50] sm:$0xff] %v2111
          %2136 = vst [vmem:[#allocation8 + $0x58] sm:$0xff] %v2113
          %2137 = vst [vmem:[#allocation8 + $0x60] sm:$0xff] %v2116
          %2138 = vst [vmem:[#allocation8 + $0x68] sm:$0xff] %v2118
          %2139 = vst [vmem:[#allocation8 + $0x70] sm:$0xff] %v2121
          %2140 = vst [vmem:[#allocation8 + $0x78] sm:$0xff] %v2123
        $region64: #{tpu_custom_call.1} parent=51 // pred_fallthru
          _
        // Predicated region
        $region65: #{tpu_custom_call.1} parent=51 // pred_check
          %p2141 = pneg %p230
        $region66: #{tpu_custom_call.1} parent=51 // pred_check_branch
          %2143 = sbr.rel (%p2141) target = $region68
        $region67: #{tpu_custom_call.1} parent=51 // pred_region
          %s2144 = smul.u32 16, %s29
          %2146 = vsyncadd [#allocation7], 0
          %s2147 = smul.addr %s2144, 8
          %s2148 = scalar_lea.hbm %s8, %s2147
          %s2149 = sshll.u32 [#allocation8], 4
          %s2150 = int_to_ptr.vmem [resolvable:$true] %s2149
          %s2151 = sshll.u32 %s2148, 4
          %s2152 = int_to_ptr.hbm [resolvable:$true] %s2151
          %2157 = dma.vmem_to_hbm [thread:$0]  %s2150, 2048, %s2152, [#allocation7], 128, 128, 8
        $region68: #{tpu_custom_call.1} parent=51 // pred_fallthru
          _
        // Predicated region
        $region69: #{tpu_custom_call.1} parent=51 // pred_check
          %p2158 = pneg %p230
        $region70: #{tpu_custom_call.1} parent=51 // pred_check_branch
          %2160 = sbr.rel (%p2158) target = $region72
        $region71: #{tpu_custom_call.1} parent=51 // pred_region
          %2162 = dma.done [#allocation7], 2048
        $region72: #{tpu_custom_call.1} parent=51 // pred_fallthru
          _
      $region52: #{tpu_custom_call.1} parent=5 // pred_fallthru
        _
      %p2163 = scmp.le.s32.totalorder 2, %s20
      // Predicated region
      $region73: #{tpu_custom_call.1} parent=5 // pred_check
        %p2164 = pneg %p2163
      $region74: #{tpu_custom_call.1} parent=5 // pred_check_branch
        %2166 = sbr.rel (%p2164) target = $region76
      $region75: #{tpu_custom_call.1} parent=5 // pred_region
        %s2167 = ssub.s32 %s20, 2
      $region76: #{tpu_custom_call.1} parent=5 // pred_fallthru
        _
    $region6: #{tpu_custom_call.1} parent=1 // loop_footer
      %s24 = sadd.s32 1, %s20
    $region7: #{tpu_custom_call.1} parent=1 // loop_footer_branch
      %19 = sbr.rel target = $region3
    $region8: #{tpu_custom_call.1} parent=1 // loop_exit
      _
    %2168 = vsyncpa [#allocation6], 1
    %s2169 = scalar_lea.sflag [#allocation6], 1
    %2170 = vsyncpa %s2169, 1
    %2171 = vsyncpa [#allocation7], 1
    %s2172 = scalar_lea.sflag [#allocation7], 1
    %2173 = vsyncpa %s2172, 1

</llo_original>
